<compile_context>
chip_gen: v7x
topology: tpu7x:2x2x1
jax: 0.10.0
libtpu: 0.0.40
codegen_flags: <defaults>
</compile_context>

<pallas_src>
import functools

import jax
import jax.numpy as jnp
from jax import lax
from jax.experimental import pallas as pl
from jax.experimental.pallas import tpu as pltpu


# ----------------------------------------------------------------------------
# Fused kernel.  Activation layout: (rows, W*C) with rows = block_n * H
# (batch block stacked along the matmul M axis), channels innermost on lanes.
# ----------------------------------------------------------------------------
def _down_block_kernel(x_ref, m1_ref, b1_ref, m2_ref, b2_ref, sel_ref,
                       bp_ref, pool_ref, *, H, W, Cout):
    f32 = jnp.float32
    mm_dtype = x_ref.dtype            # bf16 (fast path) or f32 (check path)
    M = x_ref.shape[0]                # block_n * H rows
    WCo = W * Cout

    # Row index within each image: masks stop the r-1 / r+1 taps from leaking
    # across the images stacked inside this batch block (and give the 'same'
    # zero padding at the top/bottom image rows).
    row = lax.broadcasted_iota(jnp.int32, (M, 1), 0) % H
    top_mask = (row != 0).astype(mm_dtype)          # row-1 exists in image
    bot_mask = (row != H - 1).astype(mm_dtype)      # row+1 exists in image

    def shift_up(v):                  # out[r] = v[r-1], zero at r == 0
        z = jnp.zeros((1, v.shape[1]), v.dtype)
        return jnp.concatenate([z, v[:M - 1]], axis=0)

    def shift_dn(v):                  # out[r] = v[r+1], zero at r == M-1
        z = jnp.zeros((1, v.shape[1]), v.dtype)
        return jnp.concatenate([v[1:], z], axis=0)

    def conv3x3_relu(v, m_ref, b_ref):
        # v: (M, W*C) in mm_dtype.  Column ('same') boundary is baked into the
        # banded weights (contraction K = W*C); row boundary via shift + mask.
        up = shift_up(v) * top_mask
        dn = shift_dn(v) * bot_mask
        acc = jnp.dot(up, m_ref[0], preferred_element_type=f32)
        acc = acc + jnp.dot(v, m_ref[1], preferred_element_type=f32)
        acc = acc + jnp.dot(dn, m_ref[2], preferred_element_type=f32)
        return jnp.maximum(acc + b_ref[...], 0.0)    # bias + ReLU in f32

    y1 = conv3x3_relu(x_ref[...], m1_ref, b1_ref)                 # (M, WCo)
    y2 = conv3x3_relu(y1.astype(mm_dtype), m2_ref, b2_ref)        # (M, WCo)

    # before_pooling: lane-dense (last dim W*Cout = multiple of 128) store.
    bp_ref[...] = y2

    # 2x2 / stride-2 max pool:
    #   row pairs  -> strided VMEM row reads of the just-written bp block,
    #                 then a VPU max (no MXU, no row selectors);
    #   col pairs  -> ONE exact 0/1 selection matmul gathering
    #                 [even column groups | odd column groups], then VPU max.
    even = bp_ref[pl.ds(0, M // 2, 2), :]
    odd = bp_ref[pl.ds(1, M // 2, 2), :]
    rm = jnp.maximum(even, odd)                                    # (M/2, WCo)
    picked = jnp.dot(rm, sel_ref[...], preferred_element_type=f32)
    half = (W // 2) * Cout
    pool_ref[...] = jnp.maximum(picked[:, :half], picked[:, half:])


# ----------------------------------------------------------------------------
# One-time (load-time) parameter repacking.
# ----------------------------------------------------------------------------
def _expand_conv3x3_weight(w, width):
    """PyTorch Conv2d weight (Cout, Cin, 3, 3) -> banded matmul weights of
    shape (3, width*Cin, width*Cout) for the lane-packed (rows, W*C) layout,
    with the 'same' column boundary baked in (out-of-range taps zeroed):
       M[kh, wi*Cin+ci, wo*Cout+co] = w[co, ci, kh, wi-wo+1]  if 0<=wi-wo+1<3
                                      0                       otherwise
    """
    cout, cin, kh, kw = w.shape
    wi = jnp.arange(width)
    wo = jnp.arange(width)
    k = wi[:, None] - wo[None, :] + 1                  # (wi, wo) tap index
    valid = (k >= 0) & (k < kw)
    kc = jnp.clip(k, 0, kw - 1)
    wt = jnp.transpose(w, (2, 1, 0, 3))                # (kh, cin, cout, kw)
    wg = wt[:, :, :, kc]                               # (kh, cin, cout, wi, wo)
    wg = jnp.where(valid[None, None, None], wg, 0.0)
    m = jnp.transpose(wg, (0, 3, 1, 4, 2))             # (kh, wi, cin, wo, cout)
    return m.reshape(kh, width * cin, width * cout)


def _pool_col_selector(width, cout, dtype=jnp.float32):
    """(W*Cout, W*Cout) 0/1 matrix whose output lanes are
    [even column groups | odd column groups] -- exact selection in f32."""
    l = jnp.arange(width * cout)
    m = jnp.arange((width // 2) * cout)
    j, c = m // cout, m % cout
    even = (l[:, None] == (2 * j * cout + c)[None, :]).astype(dtype)
    odd = (l[:, None] == ((2 * j + 1) * cout + c)[None, :]).astype(dtype)
    return jnp.concatenate([even, odd], axis=1)


def pack_params(params, width, mm_dtype=jnp.bfloat16):
    """Repack PyTorch-layout parameters once (call at parameter load time)."""
    w1, b1, w2, b2 = params
    cout = w1.shape[0]
    m1 = _expand_conv3x3_weight(w1, width).astype(mm_dtype)
    m2 = _expand_conv3x3_weight(w2, width).astype(mm_dtype)
    b1t = jnp.tile(b1, width).reshape(1, width * cout).astype(jnp.float32)
    b2t = jnp.tile(b2, width).reshape(1, width * cout).astype(jnp.float32)
    sel = _pool_col_selector(width, cout)
    return m1, b1t, m2, b2t, sel


def pack_activations(x_nchw, mm_dtype=jnp.bfloat16):
    """NCHW -> lane-packed 2-D (N*H, W*C). Only needed at model boundaries;
    the pooled output of one DownBlock is already in this layout for the next."""
    n, c, h, w = x_nchw.shape
    return (jnp.transpose(x_nchw, (0, 2, 3, 1))
            .reshape(n * h, w * c).astype(mm_dtype))


# ----------------------------------------------------------------------------
# Fused DownBlock forward on the packed layout (the production entry point).
# Returns (pooled, before_pooling), both packed (rows, W'*Cout) in f32.
# ----------------------------------------------------------------------------
@functools.partial(jax.jit, static_argnames=("height", "cin", "cout", "block_n"))
def down_block_forward_packed(x_packed, packed_params, *, height, cin, cout,
                              block_n=8):
    m1, b1t, m2, b2t, sel = packed_params
    rows, wc = x_packed.shape
    n = rows // height
    w = wc // cin
    b = min(block_n, n)
    assert n % b == 0 and height % 2 == 0 and w % 2 == 0

    kernel = functools.partial(_down_block_kernel, H=height, W=w, Cout=cout)
    m_rows = b * height

    bp, pooled = pl.pallas_call(
        kernel,
        out_shape=(
            jax.ShapeDtypeStruct((n * height, w * cout), jnp.float32),
            jax.ShapeDtypeStruct((n * (height // 2), (w // 2) * cout),
                                 jnp.float32),
        ),
        grid=(n // b,),
        in_specs=[
            pl.BlockSpec((m_rows, w * cin), lambda i: (i, 0)),
            # Grid-invariant blocks below (constant index_map); when scaling,
            # single-buffer them (pipeline_mode=pl.Buffered(1)) and set
            # vmem_limit_bytes to stay inside v7x's 64 MiB VMEM.
            pl.BlockSpec((3, w * cin, w * cout), lambda i: (0, 0, 0)),
            pl.BlockSpec((1, w * cout), lambda i: (0, 0)),
            pl.BlockSpec((3, w * cout, w * cout), lambda i: (0, 0, 0)),
            pl.BlockSpec((1, w * cout), lambda i: (0, 0)),
            pl.BlockSpec((w * cout, w * cout), lambda i: (0, 0)),
        ],
        out_specs=(
            pl.BlockSpec((m_rows, w * cout), lambda i: (i, 0)),
            pl.BlockSpec((m_rows // 2, (w // 2) * cout), lambda i: (i, 0)),
        ),
        compiler_params=pltpu.CompilerParams(
            dimension_semantics=("parallel",)),
    )(x_packed, m1, b1t, m2, b2t, sel)
    return pooled, bp


# ----------------------------------------------------------------------------
# NCHW adapter matching the PyTorch module interface (model boundary only).
# ----------------------------------------------------------------------------
def down_block_forward_nchw(x_nchw, params, mm_dtype=jnp.bfloat16, block_n=8):
    n, cin, h, w = x_nchw.shape
    cout = params[0].shape[0]
    packed_params = pack_params(params, w, mm_dtype)       # once per params
    xp = pack_activations(x_nchw, mm_dtype)
    pooled_p, bp_p = down_block_forward_packed(
        xp, packed_params, height=h, cin=cin, cout=cout, block_n=block_n)
    before_pool = jnp.transpose(bp_p.reshape(n, h, w, cout), (0, 3, 1, 2))
    pooled = jnp.transpose(pooled_p.reshape(n, h // 2, w // 2, cout),
                           (0, 3, 1, 2))
    return pooled, before_pool


# ----------------------------------------------------------------------------
# Pure-JAX reference (independent of the Pallas path) for verification.
# ----------------------------------------------------------------------------
def down_block_reference(x_nchw, params):
    w1, b1, w2, b2 = params
    x = jnp.transpose(x_nchw, (0, 2, 3, 1))
    dn = ("NHWC", "HWIO", "NHWC")
    hp = lax.Precision.HIGHEST
    y1 = lax.conv_general_dilated(x, jnp.transpose(w1, (2, 3, 1, 0)), (1, 1),
                                  "SAME", dimension_numbers=dn,
                                  precision=hp) + b1
    y1 = jnp.maximum(y1, 0.0)
    y2 = lax.conv_general_dilated(y1, jnp.transpose(w2, (2, 3, 1, 0)), (1, 1),
                                  "SAME", dimension_numbers=dn,
                                  precision=hp) + b2
    y2 = jnp.maximum(y2, 0.0)
    pooled = lax.reduce_window(y2, -jnp.inf, lax.max,
                               (1, 2, 2, 1), (1, 2, 2, 1), "VALID")
    return (jnp.transpose(pooled, (0, 3, 1, 2)),
            jnp.transpose(y2, (0, 3, 1, 2)))


if __name__ == "__main__":
    # DownBlock(in_channels=4, out_channels=8), batch 16 so one batch block of
    # 8 images gives M = 128 matmul rows and the grid has 2 "parallel" steps.
    N, Cin, Cout, H, W = 16, 4, 8, 16, 16

    key = jax.random.PRNGKey(0)
    ks = jax.random.split(key, 5)
    x = jax.random.normal(ks[0], (N, Cin, H, W), jnp.float32)
    w1 = 0.1 * jax.random.normal(ks[1], (Cout, Cin, 3, 3), jnp.float32)
    b1 = 0.1 * jax.random.normal(ks[2], (Cout,), jnp.float32)
    w2 = 0.1 * jax.random.normal(ks[3], (Cout, Cout, 3, 3), jnp.float32)
    b2 = 0.1 * jax.random.normal(ks[4], (Cout,), jnp.float32)
    params = (w1, b1, w2, b2)

    ref_pooled, ref_bp = jax.block_until_ready(down_block_reference(x, params))

    # f32 matmul-input path first (tight numerics check), then the bf16 fast
    # path used in production on v6e/v7x (looser tolerance: bf16 inputs).
    for mm_dtype, tol in ((jnp.float32, 2e-3), (jnp.bfloat16, 5e-2)):
        pooled, before_pool = down_block_forward_nchw(
            x, params, mm_dtype=mm_dtype, block_n=8)
        pooled, before_pool = jax.block_until_ready((pooled, before_pool))

        assert before_pool.shape == (N, Cout, H, W), before_pool.shape
        assert pooled.shape == (N, Cout, H // 2, W // 2), pooled.shape
        assert jnp.allclose(before_pool, ref_bp, rtol=tol, atol=tol), (
            str(mm_dtype), float(jnp.max(jnp.abs(before_pool - ref_bp))))
        assert jnp.allclose(pooled, ref_pooled, rtol=tol, atol=tol), (
            str(mm_dtype), float(jnp.max(jnp.abs(pooled - ref_pooled))))

    print("KERNEL_OK")
</pallas_src>

<mosaic_0001>
module attributes {stable_mosaic.version = 11 : i64} {
  func.func @_down_block_kernel(%arg0: i32, %arg1: memref<128x64xf32, #tpu.memory_space<vmem>>, %arg2: memref<3x64x128xf32, #tpu.memory_space<vmem>>, %arg3: memref<1x128xf32, #tpu.memory_space<vmem>>, %arg4: memref<3x128x128xf32, #tpu.memory_space<vmem>>, %arg5: memref<1x128xf32, #tpu.memory_space<vmem>>, %arg6: memref<128x128xf32, #tpu.memory_space<vmem>>, %arg7: memref<128x128xf32, #tpu.memory_space<vmem>>, %arg8: memref<64x64xf32, #tpu.memory_space<vmem>>) attributes {dimension_semantics = [#tpu.dimension_semantics<parallel>], iteration_bounds = array<i64: 2>, scalar_prefetch = 0 : i64, scratch_operands = 0 : i64, tpu.core_type = #tpu.core_type<tc>, window_params = [{transform_indices = @transform_0, window_bounds = array<i64: 128, 64>}, {pipeline_mode = #tpu.pipeline_mode<synchronous>, transform_indices = @transform_1, window_bounds = array<i64: 3, 64, 128>}, {pipeline_mode = #tpu.pipeline_mode<synchronous>, transform_indices = @transform_2, window_bounds = array<i64: 1, 128>}, {pipeline_mode = #tpu.pipeline_mode<synchronous>, transform_indices = @transform_3, window_bounds = array<i64: 3, 128, 128>}, {pipeline_mode = #tpu.pipeline_mode<synchronous>, transform_indices = @transform_4, window_bounds = array<i64: 1, 128>}, {pipeline_mode = #tpu.pipeline_mode<synchronous>, transform_indices = @transform_5, window_bounds = array<i64: 128, 128>}, {transform_indices = @transform_6, window_bounds = array<i64: 128, 128>}, {transform_indices = @transform_7, window_bounds = array<i64: 64, 64>}]} {
    %0 = tpu.iota {dimensions = array<i32: 0>} : vector<128x1xi32>
    %c16_i32 = arith.constant 16 : i32
    %c0_i32 = arith.constant 0 : i32
    %1 = arith.cmpi eq, %c16_i32, %c0_i32 : i32
    %c1_i32 = arith.constant 1 : i32
    %2 = arith.select %1, %c1_i32, %c16_i32 : i32
    %3 = vector.broadcast %2 : i32 to vector<128x1xi32>
    %4 = arith.remsi %0, %3 : vector<128x1xi32>
    %c0_i32_0 = arith.constant 0 : i32
    %5 = vector.broadcast %c0_i32_0 : i32 to vector<128x1xi32>
    %6 = arith.cmpi ne, %4, %5 : vector<128x1xi32>
    %c0_i32_1 = arith.constant 0 : i32
    %7 = vector.broadcast %c0_i32_1 : i32 to vector<128x1xi32>
    %8 = arith.cmpi slt, %4, %7 : vector<128x1xi32>
    %c0_i32_2 = arith.constant 0 : i32
    %9 = arith.cmpi slt, %2, %c0_i32_2 : i32
    %10 = vector.broadcast %9 : i1 to vector<128x1xi1>
    %11 = vector.broadcast %10 : vector<128x1xi1> to vector<128x1xi1>
    %12 = arith.xori %8, %11 : vector<128x1xi1>
    %13 = arith.andi %12, %6 : vector<128x1xi1>
    %14 = vector.broadcast %2 : i32 to vector<128x1xi32>
    %15 = arith.addi %4, %14 : vector<128x1xi32>
    %16 = arith.select %13, %15, %4 : vector<128x1xi1>, vector<128x1xi32>
    %c0_i32_3 = arith.constant 0 : i32
    %17 = vector.broadcast %c0_i32_3 : i32 to vector<128x1xi32>
    %18 = arith.cmpi ne, %16, %17 : vector<128x1xi32>
    %19 = arith.extui %18 : vector<128x1xi1> to vector<128x1xi32>
    %20 = arith.sitofp %19 : vector<128x1xi32> to vector<128x1xf32>
    %c15_i32 = arith.constant 15 : i32
    %21 = vector.broadcast %c15_i32 : i32 to vector<128x1xi32>
    %22 = arith.cmpi ne, %16, %21 : vector<128x1xi32>
    %23 = arith.extui %22 : vector<128x1xi1> to vector<128x1xi32>
    %24 = arith.sitofp %23 : vector<128x1xi32> to vector<128x1xf32>
    %c0 = arith.constant 0 : index
    %c0_4 = arith.constant 0 : index
    %25 = vector.load %arg1[%c0, %c0_4] : memref<128x64xf32, #tpu.memory_space<vmem>>, vector<128x64xf32>
    %cst = arith.constant 0.000000e+00 : f32
    %26 = vector.broadcast %cst : f32 to vector<1x64xf32>
    %27 = vector.extract_strided_slice %25 {offsets = [0, 0], sizes = [127, 64], strides = [1, 1]} : vector<128x64xf32> to vector<127x64xf32>
    %28 = tpu.concatenate %26, %27 in 0 : vector<1x64xf32>, vector<127x64xf32> -> vector<128x64xf32>
    %29 = vector.broadcast %20 : vector<128x1xf32> to vector<128x64xf32>
    %30 = arith.mulf %28, %29 : vector<128x64xf32>
    %cst_5 = arith.constant 0.000000e+00 : f32
    %31 = vector.broadcast %cst_5 : f32 to vector<1x64xf32>
    %32 = vector.extract_strided_slice %25 {offsets = [1, 0], sizes = [127, 64], strides = [1, 1]} : vector<128x64xf32> to vector<127x64xf32>
    %33 = tpu.concatenate %32, %31 in 0 : vector<127x64xf32>, vector<1x64xf32> -> vector<128x64xf32>
    %34 = vector.broadcast %24 : vector<128x1xf32> to vector<128x64xf32>
    %35 = arith.mulf %33, %34 : vector<128x64xf32>
    %c0_6 = arith.constant 0 : index
    %c0_7 = arith.constant 0 : index
    %c0_8 = arith.constant 0 : index
    %36 = vector.load %arg2[%c0_6, %c0_7, %c0_8] : memref<3x64x128xf32, #tpu.memory_space<vmem>>, vector<1x64x128xf32>
    %37 = vector.shape_cast %36 : vector<1x64x128xf32> to vector<64x128xf32>
    %cst_9 = arith.constant dense<0.000000e+00> : vector<128x128xf32>
    %38 = tpu.matmul %30, %37, %cst_9 {dimension_numbers = #tpu.dot_dimension_numbers<[1], [0], [0], [1], [0, 0, 1, 1], [], []>} : vector<128x64xf32>, vector<64x128xf32>, vector<128x128xf32> -> vector<128x128xf32>
    %c1 = arith.constant 1 : index
    %c0_10 = arith.constant 0 : index
    %c0_11 = arith.constant 0 : index
    %39 = vector.load %arg2[%c1, %c0_10, %c0_11] : memref<3x64x128xf32, #tpu.memory_space<vmem>>, vector<1x64x128xf32>
    %40 = vector.shape_cast %39 : vector<1x64x128xf32> to vector<64x128xf32>
    %cst_12 = arith.constant dense<0.000000e+00> : vector<128x128xf32>
    %41 = tpu.matmul %25, %40, %cst_12 {dimension_numbers = #tpu.dot_dimension_numbers<[1], [0], [0], [1], [0, 0, 1, 1], [], []>} : vector<128x64xf32>, vector<64x128xf32>, vector<128x128xf32> -> vector<128x128xf32>
    %42 = arith.addf %38, %41 : vector<128x128xf32>
    %c2 = arith.constant 2 : index
    %c0_13 = arith.constant 0 : index
    %c0_14 = arith.constant 0 : index
    %43 = vector.load %arg2[%c2, %c0_13, %c0_14] : memref<3x64x128xf32, #tpu.memory_space<vmem>>, vector<1x64x128xf32>
    %44 = vector.shape_cast %43 : vector<1x64x128xf32> to vector<64x128xf32>
    %cst_15 = arith.constant dense<0.000000e+00> : vector<128x128xf32>
    %45 = tpu.matmul %35, %44, %cst_15 {dimension_numbers = #tpu.dot_dimension_numbers<[1], [0], [0], [1], [0, 0, 1, 1], [], []>} : vector<128x64xf32>, vector<64x128xf32>, vector<128x128xf32> -> vector<128x128xf32>
    %46 = arith.addf %42, %45 : vector<128x128xf32>
    %c0_16 = arith.constant 0 : index
    %c0_17 = arith.constant 0 : index
    %47 = vector.load %arg3[%c0_16, %c0_17] : memref<1x128xf32, #tpu.memory_space<vmem>>, vector<1x128xf32>
    %48 = vector.broadcast %47 : vector<1x128xf32> to vector<128x128xf32>
    %49 = arith.addf %46, %48 : vector<128x128xf32>
    %cst_18 = arith.constant 0.000000e+00 : f32
    %50 = vector.broadcast %cst_18 : f32 to vector<128x128xf32>
    %51 = arith.maximumf %49, %50 : vector<128x128xf32>
    %cst_19 = arith.constant 0.000000e+00 : f32
    %52 = vector.broadcast %cst_19 : f32 to vector<1x128xf32>
    %53 = vector.extract_strided_slice %51 {offsets = [0, 0], sizes = [127, 128], strides = [1, 1]} : vector<128x128xf32> to vector<127x128xf32>
    %54 = tpu.concatenate %52, %53 in 0 : vector<1x128xf32>, vector<127x128xf32> -> vector<128x128xf32>
    %55 = vector.broadcast %20 : vector<128x1xf32> to vector<128x128xf32>
    %56 = arith.mulf %54, %55 : vector<128x128xf32>
    %cst_20 = arith.constant 0.000000e+00 : f32
    %57 = vector.broadcast %cst_20 : f32 to vector<1x128xf32>
    %58 = vector.extract_strided_slice %51 {offsets = [1, 0], sizes = [127, 128], strides = [1, 1]} : vector<128x128xf32> to vector<127x128xf32>
    %59 = tpu.concatenate %58, %57 in 0 : vector<127x128xf32>, vector<1x128xf32> -> vector<128x128xf32>
    %60 = vector.broadcast %24 : vector<128x1xf32> to vector<128x128xf32>
    %61 = arith.mulf %59, %60 : vector<128x128xf32>
    %c0_21 = arith.constant 0 : index
    %c0_22 = arith.constant 0 : index
    %c0_23 = arith.constant 0 : index
    %62 = vector.load %arg4[%c0_21, %c0_22, %c0_23] : memref<3x128x128xf32, #tpu.memory_space<vmem>>, vector<1x128x128xf32>
    %63 = vector.shape_cast %62 : vector<1x128x128xf32> to vector<128x128xf32>
    %cst_24 = arith.constant dense<0.000000e+00> : vector<128x128xf32>
    %64 = tpu.matmul %56, %63, %cst_24 {dimension_numbers = #tpu.dot_dimension_numbers<[1], [0], [0], [1], [0, 0, 1, 1], [], []>} : vector<128x128xf32>, vector<128x128xf32>, vector<128x128xf32> -> vector<128x128xf32>
    %c1_25 = arith.constant 1 : index
    %c0_26 = arith.constant 0 : index
    %c0_27 = arith.constant 0 : index
    %65 = vector.load %arg4[%c1_25, %c0_26, %c0_27] : memref<3x128x128xf32, #tpu.memory_space<vmem>>, vector<1x128x128xf32>
    %66 = vector.shape_cast %65 : vector<1x128x128xf32> to vector<128x128xf32>
    %cst_28 = arith.constant dense<0.000000e+00> : vector<128x128xf32>
    %67 = tpu.matmul %51, %66, %cst_28 {dimension_numbers = #tpu.dot_dimension_numbers<[1], [0], [0], [1], [0, 0, 1, 1], [], []>} : vector<128x128xf32>, vector<128x128xf32>, vector<128x128xf32> -> vector<128x128xf32>
    %68 = arith.addf %64, %67 : vector<128x128xf32>
    %c2_29 = arith.constant 2 : index
    %c0_30 = arith.constant 0 : index
    %c0_31 = arith.constant 0 : index
    %69 = vector.load %arg4[%c2_29, %c0_30, %c0_31] : memref<3x128x128xf32, #tpu.memory_space<vmem>>, vector<1x128x128xf32>
    %70 = vector.shape_cast %69 : vector<1x128x128xf32> to vector<128x128xf32>
    %cst_32 = arith.constant dense<0.000000e+00> : vector<128x128xf32>
    %71 = tpu.matmul %61, %70, %cst_32 {dimension_numbers = #tpu.dot_dimension_numbers<[1], [0], [0], [1], [0, 0, 1, 1], [], []>} : vector<128x128xf32>, vector<128x128xf32>, vector<128x128xf32> -> vector<128x128xf32>
    %72 = arith.addf %68, %71 : vector<128x128xf32>
    %c0_33 = arith.constant 0 : index
    %c0_34 = arith.constant 0 : index
    %73 = vector.load %arg5[%c0_33, %c0_34] : memref<1x128xf32, #tpu.memory_space<vmem>>, vector<1x128xf32>
    %74 = vector.broadcast %73 : vector<1x128xf32> to vector<128x128xf32>
    %75 = arith.addf %72, %74 : vector<128x128xf32>
    %cst_35 = arith.constant 0.000000e+00 : f32
    %76 = vector.broadcast %cst_35 : f32 to vector<128x128xf32>
    %77 = arith.maximumf %75, %76 : vector<128x128xf32>
    %c0_36 = arith.constant 0 : index
    %c0_37 = arith.constant 0 : index
    %78 = vector.load %arg7[%c0_36, %c0_37] : memref<128x128xf32, #tpu.memory_space<vmem>>, vector<128x128xf32>
    tpu.vector_store %arg7[%c0_36, %c0_37], %77 {strides = array<i32>} : memref<128x128xf32, #tpu.memory_space<vmem>>, vector<128x128xf32>,
    %c0_38 = arith.constant 0 : index
    %c0_39 = arith.constant 0 : index
    %79 = tpu.strided_load %arg7[%c0_38, %c0_39] {strides = array<i32: 2, 1>} : memref<128x128xf32, #tpu.memory_space<vmem>>, vector<64x128xf32>
    %c1_40 = arith.constant 1 : index
    %c0_41 = arith.constant 0 : index
    %80 = tpu.strided_load %arg7[%c1_40, %c0_41] {strides = array<i32: 2, 1>} : memref<128x128xf32, #tpu.memory_space<vmem>>, vector<64x128xf32>
    %81 = arith.maximumf %79, %80 : vector<64x128xf32>
    %c0_42 = arith.constant 0 : index
    %c0_43 = arith.constant 0 : index
    %82 = vector.load %arg6[%c0_42, %c0_43] : memref<128x128xf32, #tpu.memory_space<vmem>>, vector<128x128xf32>
    %cst_44 = arith.constant dense<0.000000e+00> : vector<64x128xf32>
    %83 = tpu.matmul %81, %82, %cst_44 {dimension_numbers = #tpu.dot_dimension_numbers<[1], [0], [0], [1], [0, 0, 1, 1], [], []>} : vector<64x128xf32>, vector<128x128xf32>, vector<64x128xf32> -> vector<64x128xf32>
    %84 = vector.extract_strided_slice %83 {offsets = [0, 0], sizes = [64, 64], strides = [1, 1]} : vector<64x128xf32> to vector<64x64xf32>
    %85 = vector.extract_strided_slice %83 {offsets = [0, 64], sizes = [64, 64], strides = [1, 1]} : vector<64x128xf32> to vector<64x64xf32>
    %86 = arith.maximumf %84, %85 : vector<64x64xf32>
    %c0_45 = arith.constant 0 : index
    %c0_46 = arith.constant 0 : index
    %87 = vector.load %arg8[%c0_45, %c0_46] : memref<64x64xf32, #tpu.memory_space<vmem>>, vector<64x64xf32>
    tpu.vector_store %arg8[%c0_45, %c0_46], %86 {strides = array<i32>} : memref<64x64xf32, #tpu.memory_space<vmem>>, vector<64x64xf32>,
    return
  }
  func.func @transform_0(%arg0: i32) -> (i32, i32) {
    %c0_i32 = arith.constant 0 : i32
    %c0_i32_0 = arith.constant 0 : i32
    return %arg0, %c0_i32 : i32, i32
  }
  func.func @transform_1(%arg0: i32) -> (i32, i32, i32) {
    %c0_i32 = arith.constant 0 : i32
    %c0_i32_0 = arith.constant 0 : i32
    %c0_i32_1 = arith.constant 0 : i32
    %c0_i32_2 = arith.constant 0 : i32
    return %c0_i32, %c0_i32_0, %c0_i32_1 : i32, i32, i32
  }
  func.func @transform_2(%arg0: i32) -> (i32, i32) {
    %c0_i32 = arith.constant 0 : i32
    %c0_i32_0 = arith.constant 0 : i32
    %c0_i32_1 = arith.constant 0 : i32
    return %c0_i32, %c0_i32_0 : i32, i32
  }
  func.func @transform_3(%arg0: i32) -> (i32, i32, i32) {
    %c0_i32 = arith.constant 0 : i32
    %c0_i32_0 = arith.constant 0 : i32
    %c0_i32_1 = arith.constant 0 : i32
    %c0_i32_2 = arith.constant 0 : i32
    return %c0_i32, %c0_i32_0, %c0_i32_1 : i32, i32, i32
  }
  func.func @transform_4(%arg0: i32) -> (i32, i32) {
    %c0_i32 = arith.constant 0 : i32
    %c0_i32_0 = arith.constant 0 : i32
    %c0_i32_1 = arith.constant 0 : i32
    return %c0_i32, %c0_i32_0 : i32, i32
  }
  func.func @transform_5(%arg0: i32) -> (i32, i32) {
    %c0_i32 = arith.constant 0 : i32
    %c0_i32_0 = arith.constant 0 : i32
    %c0_i32_1 = arith.constant 0 : i32
    return %c0_i32, %c0_i32_0 : i32, i32
  }
  func.func @transform_6(%arg0: i32) -> (i32, i32) {
    %c0_i32 = arith.constant 0 : i32
    %c0_i32_0 = arith.constant 0 : i32
    return %arg0, %c0_i32 : i32, i32
  }
  func.func @transform_7(%arg0: i32) -> (i32, i32) {
    %c0_i32 = arith.constant 0 : i32
    %c0_i32_0 = arith.constant 0 : i32
    return %arg0, %c0_i32 : i32, i32
  }
}

</mosaic_0001>

<llo_original>
// kernel: down_block_forward_packed.1
$region0: #{down_block_forward_packed.1}
  #allocation0 [shape = 'u32[]', space=smem, size = 0x4, offset = 0x4, fixed_abs, tag = 'smem constant byte address 0x4 - core index']
  #allocation1 [shape = 'u32[144,128]{1,0:T(1,128)}', space=vmem, size = 0x12000, scoped, tag = 'internal scratch']
  %s0 = inlined_call_operand.vmem [shape: f32[256,64], index: 0, kind: input, shape index: {}]
  %s1 = inlined_call_operand.hbm [shape: f32[3,64,128], index: 1, kind: input, shape index: {}]
  %s2 = inlined_call_operand.vmem [shape: f32[1,128], index: 2, kind: input, shape index: {}]
  %s3 = inlined_call_operand.vmem [shape: f32[3,128,128], index: 3, kind: input, shape index: {}]
  %s4 = inlined_call_operand.vmem [shape: f32[1,128], index: 4, kind: input, shape index: {}]
  %s5 = inlined_call_operand.hbm [shape: f32[128,128], index: 5, kind: input, shape index: {}]
  %s6 = inlined_call_operand.hbm [shape: f32[256,128], index: 6, kind: output, shape index: {0}]
  %s7 = inlined_call_operand.vmem [shape: f32[128,64], index: 7, kind: output, shape index: {1}]
  %8 = xla_tuple %s6, %s7
  %s9 = sld [smem:[#allocation0]]
  $region73: #{down_block_forward_packed.1} parent=0
    _
  %s11 = ssub.s32 1, %s9
  %s12 = scalar_select 0, %s11, %s9
  $region1: #{down_block_forward_packed.1} parent=0
    #allocation2 [shape = 'u8[98304]{0}', space=vmem, size = 0x18000, scoped, tag = 'input window, operand 1, single buffered']
    #allocation3 [shape = 's32[2]{0}', space=sflag, size = 0x8, scoped, tag = 'scoped memory for down_block_forward_packed.1']
    #allocation4 [shape = 's32[2]{0}', space=sflag, size = 0x8, scoped, tag = 'scoped memory for down_block_forward_packed.1']
    #allocation5 [shape = 'u8[65536]{0}', space=vmem, size = 0x10000, scoped, tag = 'input window, operand 5, single buffered']
    #allocation6 [shape = 's32[1]{0}', space=sflag, size = 0x4, scoped, tag = 'scoped memory for down_block_forward_packed.1']
    #allocation7 [shape = 'u8[131072]{0}', space=vmem, size = 0x20000, scoped, tag = 'output window, operand 0']
    %13 = vsyncpa [#allocation3], 0
    %14 = vsyncpa [#allocation6], 0
    %15 = vsyncpa [#allocation4], 0
    %s16 = scalar_lea.sflag [#allocation4], 1
    %17 = vsyncpa %s16, 0
    loop: start=0, step=1, limit=4
    $region2: #{down_block_forward_packed.1} parent=1 // loop_pre_header
      _
    $region3: #{down_block_forward_packed.1} parent=1 // loop_header
      %s19 = sphi 0, %s23
      %p20 = scmp.ge.s32.totalorder %s19, 4
      %s29 = sphi 0, %s31
      %s32 = sphi 0, %s29
      %s33 = sphi 0, %s32
      %s49 = sphi 0, %s33
      %s53 = sphi 0, %s53
      %s55 = sphi 0, %s53
      %s56 = sphi 0, %s55
      %s70 = sphi 0, %s56
      %s74 = sphi 0, %s74
      %s76 = sphi 0, %s74
      %s77 = sphi 0, %s76
      %s91 = sphi 0, %s77
      %s95 = sphi 0, %s95
      %s97 = sphi 0, %s95
      %s98 = sphi 0, %s97
      %s112 = sphi 0, %s98
      %s116 = sphi 0, %s116
      %s118 = sphi 0, %s116
      %s119 = sphi 0, %s118
      %s133 = sphi 0, %s119
      %s137 = sphi 0, %s137
      %s139 = sphi 0, %s137
      %s140 = sphi 0, %s139
      %s154 = sphi 0, %s140
      %s160 = sphi 0, %s162
      %s163 = sphi 0, %s160
      %s164 = sphi 0, %s163
      %s180 = sphi 0, %s164
      %s186 = sphi 0, %s188
      %s189 = sphi 0, %s186
      %s190 = sphi 0, %s189
      %s206 = sphi 0, %s190
    $region4: #{down_block_forward_packed.1} parent=1 // loop_header_branch
      %22 = sbr.rel (%p20) target = $region8
    $region5: #{down_block_forward_packed.1} parent=1 // loop_body
      %s24 = ssub.s32 %s19, 1
      %s25 = ssub.s32 %s19, 2
      %s26 = sadd.s32 %s19, 1
      %s27 = ssub.s32 %s19, %s26
      %p28 = scmp.eq.s32.totalorder %s27, 0
      %s30 = sadd.s32 %s29, 1
      %s31 = scalar_select %p28, %s29, %s30
      %p34 = pneg %p28
      %p35 = scmp.eq.s32.totalorder %s19, 1
      %p36 = por %p34, %p35
      %p37 = scmp.ne.s32.totalorder %s29, %s32
      %p38 = scmp.eq.s32.totalorder %s19, 0
      %p39 = por %p37, %p38
      %p40 = scmp.ne.s32.totalorder %s29, %s32
      %p41 = scmp.eq.s32.totalorder %s24, 1
      %p42 = por %p40, %p41
      %p43 = scmp.ne.s32.totalorder %s32, %s33
      %p44 = scmp.eq.s32.totalorder %s24, 0
      %p45 = por %p43, %p44
      %p46 = scmp.ne.s32.totalorder %s32, %s33
      %p47 = scmp.eq.s32.totalorder %s25, 1
      %p48 = por %p46, %p47
      %p50 = scmp.ne.s32.totalorder %s33, %s49
      %p51 = scmp.eq.s32.totalorder %s25, 0
      %p52 = por %p50, %p51
      %s54 = sadd.s32 %s53, 1
      %p57 = scmp.eq.s32.totalorder %s19, 1
      %p58 = scmp.ne.s32.totalorder %s53, %s55
      %p59 = scmp.eq.s32.totalorder %s19, 0
      %p60 = por %p58, %p59
      %p61 = scmp.ne.s32.totalorder %s53, %s55
      %p62 = scmp.eq.s32.totalorder %s24, 1
      %p63 = por %p61, %p62
      %p64 = scmp.ne.s32.totalorder %s55, %s56
      %p65 = scmp.eq.s32.totalorder %s24, 0
      %p66 = por %p64, %p65
      %p67 = scmp.ne.s32.totalorder %s55, %s56
      %p68 = scmp.eq.s32.totalorder %s25, 1
      %p69 = por %p67, %p68
      %p71 = scmp.ne.s32.totalorder %s56, %s70
      %p72 = scmp.eq.s32.totalorder %s25, 0
      %p73 = por %p71, %p72
      %s75 = sadd.s32 %s74, 1
      %p78 = scmp.eq.s32.totalorder %s19, 1
      %p79 = scmp.ne.s32.totalorder %s74, %s76
      %p80 = scmp.eq.s32.totalorder %s19, 0
      %p81 = por %p79, %p80
      %p82 = scmp.ne.s32.totalorder %s74, %s76
      %p83 = scmp.eq.s32.totalorder %s24, 1
      %p84 = por %p82, %p83
      %p85 = scmp.ne.s32.totalorder %s76, %s77
      %p86 = scmp.eq.s32.totalorder %s24, 0
      %p87 = por %p85, %p86
      %p88 = scmp.ne.s32.totalorder %s76, %s77
      %p89 = scmp.eq.s32.totalorder %s25, 1
      %p90 = por %p88, %p89
      %p92 = scmp.ne.s32.totalorder %s77, %s91
      %p93 = scmp.eq.s32.totalorder %s25, 0
      %p94 = por %p92, %p93
      %s96 = sadd.s32 %s95, 1
      %p99 = scmp.eq.s32.totalorder %s19, 1
      %p100 = scmp.ne.s32.totalorder %s95, %s97
      %p101 = scmp.eq.s32.totalorder %s19, 0
      %p102 = por %p100, %p101
      %p103 = scmp.ne.s32.totalorder %s95, %s97
      %p104 = scmp.eq.s32.totalorder %s24, 1
      %p105 = por %p103, %p104
      %p106 = scmp.ne.s32.totalorder %s97, %s98
      %p107 = scmp.eq.s32.totalorder %s24, 0
      %p108 = por %p106, %p107
      %p109 = scmp.ne.s32.totalorder %s97, %s98
      %p110 = scmp.eq.s32.totalorder %s25, 1
      %p111 = por %p109, %p110
      %p113 = scmp.ne.s32.totalorder %s98, %s112
      %p114 = scmp.eq.s32.totalorder %s25, 0
      %p115 = por %p113, %p114
      %s117 = sadd.s32 %s116, 1
      %p120 = scmp.eq.s32.totalorder %s19, 1
      %p121 = scmp.ne.s32.totalorder %s116, %s118
      %p122 = scmp.eq.s32.totalorder %s19, 0
      %p123 = por %p121, %p122
      %p124 = scmp.ne.s32.totalorder %s116, %s118
      %p125 = scmp.eq.s32.totalorder %s24, 1
      %p126 = por %p124, %p125
      %p127 = scmp.ne.s32.totalorder %s118, %s119
      %p128 = scmp.eq.s32.totalorder %s24, 0
      %p129 = por %p127, %p128
      %p130 = scmp.ne.s32.totalorder %s118, %s119
      %p131 = scmp.eq.s32.totalorder %s25, 1
      %p132 = por %p130, %p131
      %p134 = scmp.ne.s32.totalorder %s119, %s133
      %p135 = scmp.eq.s32.totalorder %s25, 0
      %p136 = por %p134, %p135
      %s138 = sadd.s32 %s137, 1
      %p141 = scmp.eq.s32.totalorder %s19, 1
      %p142 = scmp.ne.s32.totalorder %s137, %s139
      %p143 = scmp.eq.s32.totalorder %s19, 0
      %p144 = por %p142, %p143
      %p145 = scmp.ne.s32.totalorder %s137, %s139
      %p146 = scmp.eq.s32.totalorder %s24, 1
      %p147 = por %p145, %p146
      %p148 = scmp.ne.s32.totalorder %s139, %s140
      %p149 = scmp.eq.s32.totalorder %s24, 0
      %p150 = por %p148, %p149
      %p151 = scmp.ne.s32.totalorder %s139, %s140
      %p152 = scmp.eq.s32.totalorder %s25, 1
      %p153 = por %p151, %p152
      %p155 = scmp.ne.s32.totalorder %s140, %s154
      %p156 = scmp.eq.s32.totalorder %s25, 0
      %p157 = por %p155, %p156
      %s158 = ssub.s32 %s19, %s26
      %p159 = scmp.eq.s32.totalorder %s158, 0
      %s161 = sadd.s32 %s160, 1
      %s162 = scalar_select %p159, %s160, %s161
      %p165 = pneg %p159
      %p166 = scmp.eq.s32.totalorder %s19, 1
      %p167 = por %p165, %p166
      %p168 = scmp.ne.s32.totalorder %s160, %s163
      %p169 = scmp.eq.s32.totalorder %s19, 0
      %p170 = por %p168, %p169
      %p171 = scmp.ne.s32.totalorder %s160, %s163
      %p172 = scmp.eq.s32.totalorder %s24, 1
      %p173 = por %p171, %p172
      %p174 = scmp.ne.s32.totalorder %s163, %s164
      %p175 = scmp.eq.s32.totalorder %s24, 0
      %p176 = por %p174, %p175
      %p177 = scmp.ne.s32.totalorder %s163, %s164
      %p178 = scmp.eq.s32.totalorder %s25, 1
      %p179 = por %p177, %p178
      %p181 = scmp.ne.s32.totalorder %s164, %s180
      %p182 = scmp.eq.s32.totalorder %s25, 0
      %p183 = por %p181, %p182
      %s184 = ssub.s32 %s19, %s26
      %p185 = scmp.eq.s32.totalorder %s184, 0
      %s187 = sadd.s32 %s186, 1
      %s188 = scalar_select %p185, %s186, %s187
      %p191 = pneg %p185
      %p192 = scmp.eq.s32.totalorder %s19, 1
      %p193 = por %p191, %p192
      %p194 = scmp.ne.s32.totalorder %s186, %s189
      %p195 = scmp.eq.s32.totalorder %s19, 0
      %p196 = por %p194, %p195
      %p197 = scmp.ne.s32.totalorder %s186, %s189
      %p198 = scmp.eq.s32.totalorder %s24, 1
      %p199 = por %p197, %p198
      %p200 = scmp.ne.s32.totalorder %s189, %s190
      %p201 = scmp.eq.s32.totalorder %s24, 0
      %p202 = por %p200, %p201
      %p203 = scmp.ne.s32.totalorder %s189, %s190
      %p204 = scmp.eq.s32.totalorder %s25, 1
      %p205 = por %p203, %p204
      %p207 = scmp.ne.s32.totalorder %s190, %s206
      %p208 = scmp.eq.s32.totalorder %s25, 0
      %p209 = por %p207, %p208
      %p210 = scmp.le.s32.totalorder 1, %s19
      %p211 = scmp.lt.s32.totalorder %s19, 3
      %p212 = pnand %p210, %p211
      %p213 = pneg %p212
      // Predicated region
      $region9: #{down_block_forward_packed.1} parent=5 // pred_check
        _
      $region10: #{down_block_forward_packed.1} parent=5 // pred_check_branch
        %215 = sbr.rel (%p212) target = $region12
      $region11: #{down_block_forward_packed.1} parent=5 // pred_region
        %s216 = ssub.s32 %s19, 1
        // Predicated region
        $region13: #{down_block_forward_packed.1} parent=11 // pred_check
          %p217 = pneg %p66
        $region14: #{down_block_forward_packed.1} parent=11 // pred_check_branch
          %219 = sbr.rel (%p217) target = $region16
        $region15: #{down_block_forward_packed.1} parent=11 // pred_region
          %s221 = ssub.s32 3072, 3072
          %222 = vsyncadd [#allocation3], %s221
          %s223 = sshll.u32 [#allocation2], 4
          %s224 = int_to_ptr.vmem [resolvable:$true] %s223
          %229 = dma.hbm_to_vmem [thread:$0]  %s1, 3072, %s224, [#allocation3], 128, 128, 8
        $region16: #{down_block_forward_packed.1} parent=11 // pred_fallthru
          _
        // Predicated region
        $region17: #{down_block_forward_packed.1} parent=11 // pred_check
          %p230 = pneg %p87
        $region18: #{down_block_forward_packed.1} parent=11 // pred_check_branch
          %232 = sbr.rel (%p230) target = $region20
        $region19: #{down_block_forward_packed.1} parent=11 // pred_region
          _
        $region20: #{down_block_forward_packed.1} parent=11 // pred_fallthru
          _
        // Predicated region
        $region21: #{down_block_forward_packed.1} parent=11 // pred_check
          %p233 = pneg %p108
        $region22: #{down_block_forward_packed.1} parent=11 // pred_check_branch
          %235 = sbr.rel (%p233) target = $region24
        $region23: #{down_block_forward_packed.1} parent=11 // pred_region
          _
        $region24: #{down_block_forward_packed.1} parent=11 // pred_fallthru
          _
        // Predicated region
        $region25: #{down_block_forward_packed.1} parent=11 // pred_check
          %p236 = pneg %p129
        $region26: #{down_block_forward_packed.1} parent=11 // pred_check_branch
          %238 = sbr.rel (%p236) target = $region28
        $region27: #{down_block_forward_packed.1} parent=11 // pred_region
          _
        $region28: #{down_block_forward_packed.1} parent=11 // pred_fallthru
          _
        // Predicated region
        $region29: #{down_block_forward_packed.1} parent=11 // pred_check
          %p239 = pneg %p150
        $region30: #{down_block_forward_packed.1} parent=11 // pred_check_branch
          %241 = sbr.rel (%p239) target = $region32
        $region31: #{down_block_forward_packed.1} parent=11 // pred_region
          %s243 = ssub.s32 2048, 2048
          %244 = vsyncadd [#allocation6], %s243
          %s245 = sshll.u32 [#allocation5], 4
          %s246 = int_to_ptr.vmem [resolvable:$true] %s245
          %251 = dma.hbm_to_vmem [thread:$0]  %s5, 2048, %s246, [#allocation6], 128, 128, 8
        $region32: #{down_block_forward_packed.1} parent=11 // pred_fallthru
          _
      $region12: #{down_block_forward_packed.1} parent=5 // pred_fallthru
        _
      %p252 = scmp.lt.s32.totalorder %s19, 2
      // Predicated region
      $region33: #{down_block_forward_packed.1} parent=5 // pred_check
        %p253 = pneg %p252
      $region34: #{down_block_forward_packed.1} parent=5 // pred_check_branch
        %255 = sbr.rel (%p253) target = $region36
      $region35: #{down_block_forward_packed.1} parent=5 // pred_region
        // Predicated region
        $region37: #{down_block_forward_packed.1} parent=35 // pred_check
          %p256 = pneg %p39
        $region38: #{down_block_forward_packed.1} parent=35 // pred_check_branch
          %258 = sbr.rel (%p256) target = $region40
        $region39: #{down_block_forward_packed.1} parent=35 // pred_region
          %s259 = smul.u32 16, %s19
          %p260 = scmp.lt.s32.totalorder %s259, 31
          %s261 = scalar_select %p260, %s259, 31
          %s262 = smul.addr %s261, 8
          %s263 = scalar_lea.vmem %s0, %s262
          %s264 = smul.u32 16, %s19
        $region40: #{down_block_forward_packed.1} parent=35 // pred_fallthru
          _
      $region36: #{down_block_forward_packed.1} parent=5 // pred_fallthru
        _
      %p265 = scmp.le.s32.totalorder 1, %s19
      %p266 = scmp.lt.s32.totalorder %s19, 3
      %p267 = pnand %p265, %p266
      %p268 = pneg %p267
      // Predicated region
      $region41: #{down_block_forward_packed.1} parent=5 // pred_check
        _
      $region42: #{down_block_forward_packed.1} parent=5 // pred_check_branch
        %270 = sbr.rel (%p267) target = $region44
      $region43: #{down_block_forward_packed.1} parent=5 // pred_region
        %s271 = ssub.s32 %s19, 1
        // Predicated region
        $region45: #{down_block_forward_packed.1} parent=43 // pred_check
          %p272 = pneg %p66
        $region46: #{down_block_forward_packed.1} parent=43 // pred_check_branch
          %274 = sbr.rel (%p272) target = $region48
        $region47: #{down_block_forward_packed.1} parent=43 // pred_region
          %275 = dma.done [#allocation3], 3072
        $region48: #{down_block_forward_packed.1} parent=43 // pred_fallthru
          _
        // Predicated region
        $region49: #{down_block_forward_packed.1} parent=43 // pred_check
          %p276 = pneg %p150
        $region50: #{down_block_forward_packed.1} parent=43 // pred_check_branch
          %278 = sbr.rel (%p276) target = $region52
        $region51: #{down_block_forward_packed.1} parent=43 // pred_region
          %279 = dma.done [#allocation6], 2048
        $region52: #{down_block_forward_packed.1} parent=43 // pred_fallthru
          _
        %s280 = smul.u32 16, %s24
        %p281 = scmp.lt.s32.totalorder %s280, 31
        %s282 = scalar_select %p281, %s280, 31
        %s283 = smul.addr %s282, 8
        %s284 = scalar_lea.vmem %s0, %s283
        %p285 = pneg %p45
        %p286 = pneg %p42
        %p287 = pneg %p66
        %p288 = pneg %p63
        %p289 = pneg %p87
        %p290 = pneg %p84
        %p291 = pneg %p108
        %p292 = pneg %p105
        %p293 = pneg %p129
        %p294 = pneg %p126
        %p295 = pneg %p150
        %p296 = pneg %p147
        %p297 = pneg %p176
        %p298 = pneg %p173
        %s299 = sand.u32 %s163, 1
        %s300 = scalar_lea.sflag [#allocation4], %s299
        %s301 = sand.u32 %s163, 1
        %s302 = smul.addr %s301, 128
        %s303 = scalar_lea.vmem [#allocation7], %s302
        %p304 = pneg %p202
        %p305 = pneg %p199
        %s306 = smul.u32 8, %s24
        %p307 = scmp.lt.s32.totalorder %s306, 15
        %s308 = scalar_select %p307, %s306, 15
        %s309 = smul.addr %s308, 8
        %s310 = scalar_lea.vmem %s7, %s309
        %s311 = smul.u32 16, %s24
        %p312 = scmp.lt.s32.totalorder %s311, 31
        %s313 = scalar_select %p312, %s311, 31
        %s314 = smul.addr %s313, 8
        %s315 = scalar_lea.vmem %s0, %s314
        %s316 = smul.u32 16, %s24
        %s317 = smul.u32 16, %s24
        %s318 = smul.u32 8, %s24
        %p319 = scmp.lt.s32.totalorder %s318, 15
        %s320 = scalar_select %p319, %s318, 15
        %s321 = smul.addr %s320, 8
        %s322 = scalar_lea.vmem %s7, %s321
        %s323 = smul.u32 8, %s24
        %v324 = vlaneseq
        %v325 = vshrl.u32 %v324, 7
        %v326 = vadd.s32 %v325, 8
        %v327 = vadd.s32 %v325, 16
        %v328 = vadd.s32 %v325, 24
        %v329 = vadd.s32 %v325, 32
        %v330 = vadd.s32 %v325, 40
        %v331 = vadd.s32 %v325, 48
        %v332 = vadd.s32 %v325, 56
        %v333 = vadd.s32 %v325, 64
        %v334 = vadd.s32 %v325, 72
        %v335 = vadd.s32 %v325, 80
        %v336 = vadd.s32 %v325, 88
        %v337 = vadd.s32 %v325, 96
        %v338 = vadd.s32 %v325, 104
        %v339 = vadd.s32 %v325, 112
        %v340 = vadd.s32 %v325, 120
        %vm341 = vcmp.lt.s32.totalorder %v325, 0
        %v342 = vsub.s32 0, %v325
        %v343 = vsel %vm341, %v342, %v325
        %v344 = vshrl.u32 %v343, 4
        %v345 = vand.u32 %v343, 15
        %v346 = vsub.s32 0, %v345
        %v347 = vsel %vm341, %v346, %v345
        %vm348 = vcmp.lt.s32.totalorder %v326, 0
        %v349 = vsub.s32 0, %v326
        %v350 = vsel %vm348, %v349, %v326
        %v351 = vshrl.u32 %v350, 4
        %v352 = vand.u32 %v350, 15
        %v353 = vsub.s32 0, %v352
        %v354 = vsel %vm348, %v353, %v352
        %vm355 = vcmp.lt.s32.totalorder %v327, 0
        %v356 = vsub.s32 0, %v327
        %v357 = vsel %vm355, %v356, %v327
        %v358 = vshrl.u32 %v357, 4
        %v359 = vand.u32 %v357, 15
        %v360 = vsub.s32 0, %v359
        %v361 = vsel %vm355, %v360, %v359
        %vm362 = vcmp.lt.s32.totalorder %v328, 0
        %v363 = vsub.s32 0, %v328
        %v364 = vsel %vm362, %v363, %v328
        %v365 = vshrl.u32 %v364, 4
        %v366 = vand.u32 %v364, 15
        %v367 = vsub.s32 0, %v366
        %v368 = vsel %vm362, %v367, %v366
        %vm369 = vcmp.lt.s32.totalorder %v329, 0
        %v370 = vsub.s32 0, %v329
        %v371 = vsel %vm369, %v370, %v329
        %v372 = vshrl.u32 %v371, 4
        %v373 = vand.u32 %v371, 15
        %v374 = vsub.s32 0, %v373
        %v375 = vsel %vm369, %v374, %v373
        %vm376 = vcmp.lt.s32.totalorder %v330, 0
        %v377 = vsub.s32 0, %v330
        %v378 = vsel %vm376, %v377, %v330
        %v379 = vshrl.u32 %v378, 4
        %v380 = vand.u32 %v378, 15
        %v381 = vsub.s32 0, %v380
        %v382 = vsel %vm376, %v381, %v380
        %vm383 = vcmp.lt.s32.totalorder %v331, 0
        %v384 = vsub.s32 0, %v331
        %v385 = vsel %vm383, %v384, %v331
        %v386 = vshrl.u32 %v385, 4
        %v387 = vand.u32 %v385, 15
        %v388 = vsub.s32 0, %v387
        %v389 = vsel %vm383, %v388, %v387
        %vm390 = vcmp.lt.s32.totalorder %v332, 0
        %v391 = vsub.s32 0, %v332
        %v392 = vsel %vm390, %v391, %v332
        %v393 = vshrl.u32 %v392, 4
        %v394 = vand.u32 %v392, 15
        %v395 = vsub.s32 0, %v394
        %v396 = vsel %vm390, %v395, %v394
        %vm397 = vcmp.lt.s32.totalorder %v333, 0
        %v398 = vsub.s32 0, %v333
        %v399 = vsel %vm397, %v398, %v333
        %v400 = vshrl.u32 %v399, 4
        %v401 = vand.u32 %v399, 15
        %v402 = vsub.s32 0, %v401
        %v403 = vsel %vm397, %v402, %v401
        %vm404 = vcmp.lt.s32.totalorder %v334, 0
        %v405 = vsub.s32 0, %v334
        %v406 = vsel %vm404, %v405, %v334
        %v407 = vshrl.u32 %v406, 4
        %v408 = vand.u32 %v406, 15
        %v409 = vsub.s32 0, %v408
        %v410 = vsel %vm404, %v409, %v408
        %vm411 = vcmp.lt.s32.totalorder %v335, 0
        %v412 = vsub.s32 0, %v335
        %v413 = vsel %vm411, %v412, %v335
        %v414 = vshrl.u32 %v413, 4
        %v415 = vand.u32 %v413, 15
        %v416 = vsub.s32 0, %v415
        %v417 = vsel %vm411, %v416, %v415
        %vm418 = vcmp.lt.s32.totalorder %v336, 0
        %v419 = vsub.s32 0, %v336
        %v420 = vsel %vm418, %v419, %v336
        %v421 = vshrl.u32 %v420, 4
        %v422 = vand.u32 %v420, 15
        %v423 = vsub.s32 0, %v422
        %v424 = vsel %vm418, %v423, %v422
        %vm425 = vcmp.lt.s32.totalorder %v337, 0
        %v426 = vsub.s32 0, %v337
        %v427 = vsel %vm425, %v426, %v337
        %v428 = vshrl.u32 %v427, 4
        %v429 = vand.u32 %v427, 15
        %v430 = vsub.s32 0, %v429
        %v431 = vsel %vm425, %v430, %v429
        %vm432 = vcmp.lt.s32.totalorder %v338, 0
        %v433 = vsub.s32 0, %v338
        %v434 = vsel %vm432, %v433, %v338
        %v435 = vshrl.u32 %v434, 4
        %v436 = vand.u32 %v434, 15
        %v437 = vsub.s32 0, %v436
        %v438 = vsel %vm432, %v437, %v436
        %vm439 = vcmp.lt.s32.totalorder %v339, 0
        %v440 = vsub.s32 0, %v339
        %v441 = vsel %vm439, %v440, %v339
        %v442 = vshrl.u32 %v441, 4
        %v443 = vand.u32 %v441, 15
        %v444 = vsub.s32 0, %v443
        %v445 = vsel %vm439, %v444, %v443
        %vm446 = vcmp.lt.s32.totalorder %v340, 0
        %v447 = vsub.s32 0, %v340
        %v448 = vsel %vm446, %v447, %v340
        %v449 = vshrl.u32 %v448, 4
        %v450 = vand.u32 %v448, 15
        %v451 = vsub.s32 0, %v450
        %v452 = vsel %vm446, %v451, %v450
        %vm453 = vcmp.ne.s32.totalorder %v347, 0
        %vm454 = vcmp.ne.s32.totalorder %v354, 0
        %vm455 = vcmp.ne.s32.totalorder %v361, 0
        %vm456 = vcmp.ne.s32.totalorder %v368, 0
        %vm457 = vcmp.ne.s32.totalorder %v375, 0
        %vm458 = vcmp.ne.s32.totalorder %v382, 0
        %vm459 = vcmp.ne.s32.totalorder %v389, 0
        %vm460 = vcmp.ne.s32.totalorder %v396, 0
        %vm461 = vcmp.ne.s32.totalorder %v403, 0
        %vm462 = vcmp.ne.s32.totalorder %v410, 0
        %vm463 = vcmp.ne.s32.totalorder %v417, 0
        %vm464 = vcmp.ne.s32.totalorder %v424, 0
        %vm465 = vcmp.ne.s32.totalorder %v431, 0
        %vm466 = vcmp.ne.s32.totalorder %v438, 0
        %vm467 = vcmp.ne.s32.totalorder %v445, 0
        %vm468 = vcmp.ne.s32.totalorder %v452, 0
        %vm469 = vcmp.lt.s32.totalorder %v347, 0
        %vm470 = vcmp.lt.s32.totalorder %v354, 0
        %vm471 = vcmp.lt.s32.totalorder %v361, 0
        %vm472 = vcmp.lt.s32.totalorder %v368, 0
        %vm473 = vcmp.lt.s32.totalorder %v375, 0
        %vm474 = vcmp.lt.s32.totalorder %v382, 0
        %vm475 = vcmp.lt.s32.totalorder %v389, 0
        %vm476 = vcmp.lt.s32.totalorder %v396, 0
        %vm477 = vcmp.lt.s32.totalorder %v403, 0
        %vm478 = vcmp.lt.s32.totalorder %v410, 0
        %vm479 = vcmp.lt.s32.totalorder %v417, 0
        %vm480 = vcmp.lt.s32.totalorder %v424, 0
        %vm481 = vcmp.lt.s32.totalorder %v431, 0
        %vm482 = vcmp.lt.s32.totalorder %v438, 0
        %vm483 = vcmp.lt.s32.totalorder %v445, 0
        %vm484 = vcmp.lt.s32.totalorder %v452, 0
        %vm485 = vmand %vm469, %vm453
        %vm486 = vmand %vm470, %vm454
        %vm487 = vmand %vm471, %vm455
        %vm488 = vmand %vm472, %vm456
        %vm489 = vmand %vm473, %vm457
        %vm490 = vmand %vm474, %vm458
        %vm491 = vmand %vm475, %vm459
        %vm492 = vmand %vm476, %vm460
        %vm493 = vmand %vm477, %vm461
        %vm494 = vmand %vm478, %vm462
        %vm495 = vmand %vm479, %vm463
        %vm496 = vmand %vm480, %vm464
        %vm497 = vmand %vm481, %vm465
        %vm498 = vmand %vm482, %vm466
        %vm499 = vmand %vm483, %vm467
        %vm500 = vmand %vm484, %vm468
        %v501 = vadd.s32 %v347, 16
        %v502 = vadd.s32 %v354, 16
        %v503 = vadd.s32 %v361, 16
        %v504 = vadd.s32 %v368, 16
        %v505 = vadd.s32 %v375, 16
        %v506 = vadd.s32 %v382, 16
        %v507 = vadd.s32 %v389, 16
        %v508 = vadd.s32 %v396, 16
        %v509 = vadd.s32 %v403, 16
        %v510 = vadd.s32 %v410, 16
        %v511 = vadd.s32 %v417, 16
        %v512 = vadd.s32 %v424, 16
        %v513 = vadd.s32 %v431, 16
        %v514 = vadd.s32 %v438, 16
        %v515 = vadd.s32 %v445, 16
        %v516 = vadd.s32 %v452, 16
        %v517 = vsel %vm485, %v501, %v347
        %v518 = vsel %vm486, %v502, %v354
        %v519 = vsel %vm487, %v503, %v361
        %v520 = vsel %vm488, %v504, %v368
        %v521 = vsel %vm489, %v505, %v375
        %v522 = vsel %vm490, %v506, %v382
        %v523 = vsel %vm491, %v507, %v389
        %v524 = vsel %vm492, %v508, %v396
        %v525 = vsel %vm493, %v509, %v403
        %v526 = vsel %vm494, %v510, %v410
        %v527 = vsel %vm495, %v511, %v417
        %v528 = vsel %vm496, %v512, %v424
        %v529 = vsel %vm497, %v513, %v431
        %v530 = vsel %vm498, %v514, %v438
        %v531 = vsel %vm499, %v515, %v445
        %v532 = vsel %vm500, %v516, %v452
        %vm533 = vcmp.ne.s32.totalorder %v517, 0
        %vm534 = vcmp.ne.s32.totalorder %v518, 0
        %vm535 = vcmp.ne.s32.totalorder %v519, 0
        %vm536 = vcmp.ne.s32.totalorder %v520, 0
        %vm537 = vcmp.ne.s32.totalorder %v521, 0
        %vm538 = vcmp.ne.s32.totalorder %v522, 0
        %vm539 = vcmp.ne.s32.totalorder %v523, 0
        %vm540 = vcmp.ne.s32.totalorder %v524, 0
        %vm541 = vcmp.ne.s32.totalorder %v525, 0
        %vm542 = vcmp.ne.s32.totalorder %v526, 0
        %vm543 = vcmp.ne.s32.totalorder %v527, 0
        %vm544 = vcmp.ne.s32.totalorder %v528, 0
        %vm545 = vcmp.ne.s32.totalorder %v529, 0
        %vm546 = vcmp.ne.s32.totalorder %v530, 0
        %vm547 = vcmp.ne.s32.totalorder %v531, 0
        %vm548 = vcmp.ne.s32.totalorder %v532, 0
        %v549 = vsel %vm533, 1, 0
        %v550 = vsel %vm534, 1, 0
        %v551 = vsel %vm535, 1, 0
        %v552 = vsel %vm536, 1, 0
        %v553 = vsel %vm537, 1, 0
        %v554 = vsel %vm538, 1, 0
        %v555 = vsel %vm539, 1, 0
        %v556 = vsel %vm540, 1, 0
        %v557 = vsel %vm541, 1, 0
        %v558 = vsel %vm542, 1, 0
        %v559 = vsel %vm543, 1, 0
        %v560 = vsel %vm544, 1, 0
        %v561 = vsel %vm545, 1, 0
        %v562 = vsel %vm546, 1, 0
        %v563 = vsel %vm547, 1, 0
        %v564 = vsel %vm548, 1, 0
        %v565 = vcvt.s32.f32 %v549
        %v566 = vcvt.s32.f32 %v550
        %v567 = vcvt.s32.f32 %v551
        %v568 = vcvt.s32.f32 %v552
        %v569 = vcvt.s32.f32 %v553
        %v570 = vcvt.s32.f32 %v554
        %v571 = vcvt.s32.f32 %v555
        %v572 = vcvt.s32.f32 %v556
        %v573 = vcvt.s32.f32 %v557
        %v574 = vcvt.s32.f32 %v558
        %v575 = vcvt.s32.f32 %v559
        %v576 = vcvt.s32.f32 %v560
        %v577 = vcvt.s32.f32 %v561
        %v578 = vcvt.s32.f32 %v562
        %v579 = vcvt.s32.f32 %v563
        %v580 = vcvt.s32.f32 %v564
        %vm581 = vcmp.ne.s32.totalorder %v517, 15
        %vm582 = vcmp.ne.s32.totalorder %v518, 15
        %vm583 = vcmp.ne.s32.totalorder %v519, 15
        %vm584 = vcmp.ne.s32.totalorder %v520, 15
        %vm585 = vcmp.ne.s32.totalorder %v521, 15
        %vm586 = vcmp.ne.s32.totalorder %v522, 15
        %vm587 = vcmp.ne.s32.totalorder %v523, 15
        %vm588 = vcmp.ne.s32.totalorder %v524, 15
        %vm589 = vcmp.ne.s32.totalorder %v525, 15
        %vm590 = vcmp.ne.s32.totalorder %v526, 15
        %vm591 = vcmp.ne.s32.totalorder %v527, 15
        %vm592 = vcmp.ne.s32.totalorder %v528, 15
        %vm593 = vcmp.ne.s32.totalorder %v529, 15
        %vm594 = vcmp.ne.s32.totalorder %v530, 15
        %vm595 = vcmp.ne.s32.totalorder %v531, 15
        %vm596 = vcmp.ne.s32.totalorder %v532, 15
        %v597 = vsel %vm581, 1, 0
        %v598 = vsel %vm582, 1, 0
        %v599 = vsel %vm583, 1, 0
        %v600 = vsel %vm584, 1, 0
        %v601 = vsel %vm585, 1, 0
        %v602 = vsel %vm586, 1, 0
        %v603 = vsel %vm587, 1, 0
        %v604 = vsel %vm588, 1, 0
        %v605 = vsel %vm589, 1, 0
        %v606 = vsel %vm590, 1, 0
        %v607 = vsel %vm591, 1, 0
        %v608 = vsel %vm592, 1, 0
        %v609 = vsel %vm593, 1, 0
        %v610 = vsel %vm594, 1, 0
        %v611 = vsel %vm595, 1, 0
        %v612 = vsel %vm596, 1, 0
        %v613 = vcvt.s32.f32 %v597
        %v614 = vcvt.s32.f32 %v598
        %v615 = vcvt.s32.f32 %v599
        %v616 = vcvt.s32.f32 %v600
        %v617 = vcvt.s32.f32 %v601
        %v618 = vcvt.s32.f32 %v602
        %v619 = vcvt.s32.f32 %v603
        %v620 = vcvt.s32.f32 %v604
        %v621 = vcvt.s32.f32 %v605
        %v622 = vcvt.s32.f32 %v606
        %v623 = vcvt.s32.f32 %v607
        %v624 = vcvt.s32.f32 %v608
        %v625 = vcvt.s32.f32 %v609
        %v626 = vcvt.s32.f32 %v610
        %v627 = vcvt.s32.f32 %v611
        %v628 = vcvt.s32.f32 %v612
        %v629 = vld [vmem:[%s315] sm:$0xff]
        %v630 = vld [vmem:[%s315 + $0x8] sm:$0xff]
        %v631 = vld [vmem:[%s315 + $0x10] sm:$0xff]
        %v632 = vld [vmem:[%s315 + $0x18] sm:$0xff]
        %v633 = vld [vmem:[%s315 + $0x20] sm:$0xff]
        %v634 = vld [vmem:[%s315 + $0x28] sm:$0xff]
        %v635 = vld [vmem:[%s315 + $0x30] sm:$0xff]
        %v636 = vld [vmem:[%s315 + $0x38] sm:$0xff]
        %v637 = vld [vmem:[%s315 + $0x40] sm:$0xff]
        %v638 = vld [vmem:[%s315 + $0x48] sm:$0xff]
        %v639 = vld [vmem:[%s315 + $0x50] sm:$0xff]
        %v640 = vld [vmem:[%s315 + $0x58] sm:$0xff]
        %v641 = vld [vmem:[%s315 + $0x60] sm:$0xff]
        %v642 = vld [vmem:[%s315 + $0x68] sm:$0xff]
        %v643 = vld [vmem:[%s315 + $0x70] sm:$0xff]
        %v644 = vld [vmem:[%s315 + $0x78] sm:$0xff]
        %vm661 = vcmask 1040384
        %v662 = vrot.slane %v629, 7
        %v663 = vrot.slane %v630, 7
        %v664 = vsel %vm661, %v662, %v663
        %v665 = vrot.slane %v631, 7
        %v666 = vsel %vm661, %v663, %v665
        %v667 = vrot.slane %v632, 7
        %v668 = vsel %vm661, %v665, %v667
        %v669 = vrot.slane %v633, 7
        %v670 = vsel %vm661, %v667, %v669
        %v671 = vrot.slane %v634, 7
        %v672 = vsel %vm661, %v669, %v671
        %v673 = vrot.slane %v635, 7
        %v674 = vsel %vm661, %v671, %v673
        %v675 = vrot.slane %v636, 7
        %v676 = vsel %vm661, %v673, %v675
        %v677 = vrot.slane %v637, 7
        %v678 = vsel %vm661, %v675, %v677
        %v679 = vrot.slane %v638, 7
        %v680 = vsel %vm661, %v677, %v679
        %v681 = vrot.slane %v639, 7
        %v682 = vsel %vm661, %v679, %v681
        %v683 = vrot.slane %v640, 7
        %v684 = vsel %vm661, %v681, %v683
        %v685 = vrot.slane %v641, 7
        %v686 = vsel %vm661, %v683, %v685
        %v687 = vrot.slane %v642, 7
        %v688 = vsel %vm661, %v685, %v687
        %v689 = vrot.slane %v643, 7
        %v690 = vsel %vm661, %v687, %v689
        %v691 = vrot.slane %v644, 7
        %v692 = vsel %vm661, %v689, %v691
        %v709 = vsel %vm661, 0.0, %v662
        %v710 = vmul.f32 %v709, %v565
        %v711 = vmul.f32 %v664, %v566
        %v712 = vmul.f32 %v666, %v567
        %v713 = vmul.f32 %v668, %v568
        %v714 = vmul.f32 %v670, %v569
        %v715 = vmul.f32 %v672, %v570
        %v716 = vmul.f32 %v674, %v571
        %v717 = vmul.f32 %v676, %v572
        %v718 = vmul.f32 %v678, %v573
        %v719 = vmul.f32 %v680, %v574
        %v720 = vmul.f32 %v682, %v575
        %v721 = vmul.f32 %v684, %v576
        %v722 = vmul.f32 %v686, %v577
        %v723 = vmul.f32 %v688, %v578
        %v724 = vmul.f32 %v690, %v579
        %v725 = vmul.f32 %v692, %v580
        %vm726 = vcmask 1046528
        %v727 = vrot.slane %v629, 1
        %v728 = vrot.slane %v630, 1
        %v729 = vsel %vm726, %v727, %v728
        %v730 = vrot.slane %v631, 1
        %v731 = vsel %vm726, %v728, %v730
        %v732 = vrot.slane %v632, 1
        %v733 = vsel %vm726, %v730, %v732
        %v734 = vrot.slane %v633, 1
        %v735 = vsel %vm726, %v732, %v734
        %v736 = vrot.slane %v634, 1
        %v737 = vsel %vm726, %v734, %v736
        %v738 = vrot.slane %v635, 1
        %v739 = vsel %vm726, %v736, %v738
        %v740 = vrot.slane %v636, 1
        %v741 = vsel %vm726, %v738, %v740
        %v742 = vrot.slane %v637, 1
        %v743 = vsel %vm726, %v740, %v742
        %v744 = vrot.slane %v638, 1
        %v745 = vsel %vm726, %v742, %v744
        %v746 = vrot.slane %v639, 1
        %v747 = vsel %vm726, %v744, %v746
        %v748 = vrot.slane %v640, 1
        %v749 = vsel %vm726, %v746, %v748
        %v750 = vrot.slane %v641, 1
        %v751 = vsel %vm726, %v748, %v750
        %v752 = vrot.slane %v642, 1
        %v753 = vsel %vm726, %v750, %v752
        %v754 = vrot.slane %v643, 1
        %v755 = vsel %vm726, %v752, %v754
        %v756 = vrot.slane %v644, 1
        %v757 = vsel %vm726, %v754, %v756
        %v774 = vsel %vm726, %v756, 0.0
        %v775 = vmul.f32 %v729, %v613
        %v776 = vmul.f32 %v731, %v614
        %v777 = vmul.f32 %v733, %v615
        %v778 = vmul.f32 %v735, %v616
        %v779 = vmul.f32 %v737, %v617
        %v780 = vmul.f32 %v739, %v618
        %v781 = vmul.f32 %v741, %v619
        %v782 = vmul.f32 %v743, %v620
        %v783 = vmul.f32 %v745, %v621
        %v784 = vmul.f32 %v747, %v622
        %v785 = vmul.f32 %v749, %v623
        %v786 = vmul.f32 %v751, %v624
        %v787 = vmul.f32 %v753, %v625
        %v788 = vmul.f32 %v755, %v626
        %v789 = vmul.f32 %v757, %v627
        %v790 = vmul.f32 %v774, %v628
        %v791 = vld [vmem:[#allocation2] sm:$0xff]
        %v792 = vld [vmem:[#allocation2 + $0x8] sm:$0xff]
        %v793 = vld [vmem:[#allocation2 + $0x10] sm:$0xff]
        %v794 = vld [vmem:[#allocation2 + $0x18] sm:$0xff]
        %v795 = vld [vmem:[#allocation2 + $0x20] sm:$0xff]
        %v796 = vld [vmem:[#allocation2 + $0x28] sm:$0xff]
        %v797 = vld [vmem:[#allocation2 + $0x30] sm:$0xff]
        %v798 = vld [vmem:[#allocation2 + $0x38] sm:$0xff]
        %s799 = scalar_lea.vmem [#allocation2], 64
        %v800 = vld [vmem:[%s799] sm:$0xff]
        %v801 = vld [vmem:[%s799 + $0x8] sm:$0xff]
        %v802 = vld [vmem:[%s799 + $0x10] sm:$0xff]
        %v803 = vld [vmem:[%s799 + $0x18] sm:$0xff]
        %v804 = vld [vmem:[%s799 + $0x20] sm:$0xff]
        %v805 = vld [vmem:[%s799 + $0x28] sm:$0xff]
        %v806 = vld [vmem:[%s799 + $0x30] sm:$0xff]
        %v807 = vld [vmem:[%s799 + $0x38] sm:$0xff]
        %vm808 = vcmask 523264
        %v809 = vsel %vm808, %v629, 0
        %v811 = vsel %vm808, %v630, 0
        %v813 = vsel %vm808, %v631, 0
        %v815 = vsel %vm808, %v632, 0
        %v817 = vsel %vm808, %v633, 0
        %v819 = vsel %vm808, %v634, 0
        %v821 = vsel %vm808, %v635, 0
        %v823 = vsel %vm808, %v636, 0
        %v825 = vsel %vm808, %v637, 0
        %v827 = vsel %vm808, %v638, 0
        %v829 = vsel %vm808, %v639, 0
        %v831 = vsel %vm808, %v640, 0
        %v833 = vsel %vm808, %v641, 0
        %v835 = vsel %vm808, %v642, 0
        %v837 = vsel %vm808, %v643, 0
        %v839 = vsel %vm808, %v644, 0
        %841 = vmatprep.subr.mxu0 0.0
        %842 = vmatpush1.msra.mxu0 %v800
        %843 = vmatprep.subr.mxu0 0.0
        %844 = vmatpush1.msra.mxu0 %v801
        %845 = vmatprep.subr.mxu0 0.0
        %846 = vmatpush1.msra.mxu0 %v802
        %847 = vmatprep.subr.mxu0 0.0
        %848 = vmatpush1.msra.mxu0 %v803
        %849 = vmatprep.subr.mxu0 0.0
        %850 = vmatpush1.msra.mxu0 %v804
        %851 = vmatprep.subr.mxu0 0.0
        %852 = vmatpush1.msra.mxu0 %v805
        %853 = vmatprep.subr.mxu0 0.0
        %854 = vmatpush1.msra.mxu0 %v806
        %855 = vmatprep.subr.mxu0 0.0
        %856 = vmatpush1.msra.mxu0 %v807
        %857 = vmatprep.subr.mxu0 0.0
        %858 = vmatpush1.msra.mxu0 0.0
        %859 = vmatprep.subr.mxu0 0.0
        %860 = vmatpush1.msra.mxu0 0.0
        %861 = vmatprep.subr.mxu0 0.0
        %862 = vmatpush1.msra.mxu0 0.0
        %863 = vmatprep.subr.mxu0 0.0
        %864 = vmatpush1.msra.mxu0 0.0
        %865 = vmatprep.subr.mxu0 0.0
        %866 = vmatpush1.msra.mxu0 0.0
        %867 = vmatprep.subr.mxu0 0.0
        %868 = vmatpush1.msra.mxu0 0.0
        %869 = vmatprep.subr.mxu0 0.0
        %870 = vmatpush1.msra.mxu0 0.0
        %871 = vmatprep.subr.mxu0 0.0
        %872 = vmatpush1.msra.mxu0 0.0
        %873 = vmatprep.subr.mxu0 0.0
        %874 = vmatpush1.msra.mxu0 0.0
        %875 = vmatprep.subr.mxu0 0.0
        %876 = vmatpush1.msra.mxu0 0.0
        %877 = vmatprep.subr.mxu0 0.0
        %878 = vmatpush1.msra.mxu0 0.0
        %879 = vmatprep.subr.mxu0 0.0
        %880 = vmatpush1.msra.mxu0 0.0
        %881 = vmatprep.subr.mxu0 0.0
        %882 = vmatpush1.msra.mxu0 0.0
        %883 = vmatprep.subr.mxu0 0.0
        %884 = vmatpush1.msra.mxu0 0.0
        %885 = vmatprep.subr.mxu0 0.0
        %886 = vmatpush1.msra.mxu0 0.0
        %887 = vmatprep.subr.mxu0 0.0
        %888 = vmatpush1.msra.mxu0 0.0
        %889 = vmatprep.subr.mxu0 0.0
        %890 = vmatpush1.msra.mxu0 0.0
        %891 = vmatprep.subr.mxu0 0.0
        %892 = vmatpush1.msra.mxu0 0.0
        %893 = vmatprep.subr.mxu0 0.0
        %894 = vmatpush1.msra.mxu0 0.0
        %895 = vmatprep.subr.mxu0 0.0
        %896 = vmatpush1.msra.mxu0 0.0
        %897 = vmatprep.subr.mxu0 0.0
        %898 = vmatpush1.msra.mxu0 0.0
        %899 = vmatprep.subr.mxu0 0.0
        %900 = vmatpush1.msra.mxu0 0.0
        %901 = vmatprep.subr.mxu0 0.0
        %902 = vmatpush1.msra.mxu0 0.0
        %903 = vmatprep.subr.mxu0 0.0
        %904 = vmatpush1.msra.mxu0 0.0
        %905 = vmatprep.mubr.f32.mxu0 0.0
        %906 = vmatmul.mubr.f32.gmra.mrb[0].mxu0 %v809
        %v907 = vpop.f32.mrb[0].mxu0
        %v908 = vadd.f32 0.0, %v907
        %v909 = vpop.f32.mrb[0].mxu0
        %910 = vmatprep.mubr.f32.mxu0 0.0
        %911 = vmatmul.mubr.f32.gmra.mrb[0].mxu0 %v811
        %v912 = vpop.f32.mrb[0].mxu0
        %v913 = vadd.f32 0.0, %v912
        %v914 = vpop.f32.mrb[0].mxu0
        %915 = vmatprep.mubr.f32.mxu0 0.0
        %916 = vmatmul.mubr.f32.gmra.mrb[0].mxu0 %v813
        %v917 = vpop.f32.mrb[0].mxu0
        %v918 = vadd.f32 0.0, %v917
        %v919 = vpop.f32.mrb[0].mxu0
        %920 = vmatprep.mubr.f32.mxu0 0.0
        %921 = vmatmul.mubr.f32.gmra.mrb[0].mxu0 %v815
        %v922 = vpop.f32.mrb[0].mxu0
        %v923 = vadd.f32 0.0, %v922
        %v924 = vpop.f32.mrb[0].mxu0
        %925 = vmatprep.mubr.f32.mxu0 0.0
        %926 = vmatmul.mubr.f32.gmra.mrb[0].mxu0 %v817
        %v927 = vpop.f32.mrb[0].mxu0
        %v928 = vadd.f32 0.0, %v927
        %v929 = vpop.f32.mrb[0].mxu0
        %930 = vmatprep.mubr.f32.mxu0 0.0
        %931 = vmatmul.mubr.f32.gmra.mrb[0].mxu0 %v819
        %v932 = vpop.f32.mrb[0].mxu0
        %v933 = vadd.f32 0.0, %v932
        %v934 = vpop.f32.mrb[0].mxu0
        %935 = vmatprep.mubr.f32.mxu0 0.0
        %936 = vmatmul.mubr.f32.gmra.mrb[0].mxu0 %v821
        %v937 = vpop.f32.mrb[0].mxu0
        %v938 = vadd.f32 0.0, %v937
        %v939 = vpop.f32.mrb[0].mxu0
        %940 = vmatprep.mubr.f32.mxu0 0.0
        %941 = vmatmul.mubr.f32.gmra.mrb[0].mxu0 %v823
        %v942 = vpop.f32.mrb[0].mxu0
        %v943 = vadd.f32 0.0, %v942
        %v944 = vpop.f32.mrb[0].mxu0
        %945 = vmatprep.mubr.f32.mxu0 0.0
        %946 = vmatmul.mubr.f32.gmra.mrb[0].mxu0 %v825
        %v947 = vpop.f32.mrb[0].mxu0
        %v948 = vadd.f32 0.0, %v947
        %v949 = vpop.f32.mrb[0].mxu0
        %950 = vmatprep.mubr.f32.mxu0 0.0
        %951 = vmatmul.mubr.f32.gmra.mrb[0].mxu0 %v827
        %v952 = vpop.f32.mrb[0].mxu0
        %v953 = vadd.f32 0.0, %v952
        %v954 = vpop.f32.mrb[0].mxu0
        %955 = vmatprep.mubr.f32.mxu0 0.0
        %956 = vmatmul.mubr.f32.gmra.mrb[0].mxu0 %v829
        %v957 = vpop.f32.mrb[0].mxu0
        %v958 = vadd.f32 0.0, %v957
        %v959 = vpop.f32.mrb[0].mxu0
        %960 = vmatprep.mubr.f32.mxu0 0.0
        %961 = vmatmul.mubr.f32.gmra.mrb[0].mxu0 %v831
        %v962 = vpop.f32.mrb[0].mxu0
        %v963 = vadd.f32 0.0, %v962
        %v964 = vpop.f32.mrb[0].mxu0
        %965 = vmatprep.mubr.f32.mxu0 0.0
        %966 = vmatmul.mubr.f32.gmra.mrb[0].mxu0 %v833
        %v967 = vpop.f32.mrb[0].mxu0
        %v968 = vadd.f32 0.0, %v967
        %v969 = vpop.f32.mrb[0].mxu0
        %970 = vmatprep.mubr.f32.mxu0 0.0
        %971 = vmatmul.mubr.f32.gmra.mrb[0].mxu0 %v835
        %v972 = vpop.f32.mrb[0].mxu0
        %v973 = vadd.f32 0.0, %v972
        %v974 = vpop.f32.mrb[0].mxu0
        %975 = vmatprep.mubr.f32.mxu0 0.0
        %976 = vmatmul.mubr.f32.gmra.mrb[0].mxu0 %v837
        %v977 = vpop.f32.mrb[0].mxu0
        %v978 = vadd.f32 0.0, %v977
        %v979 = vpop.f32.mrb[0].mxu0
        %980 = vmatprep.mubr.f32.mxu0 0.0
        %981 = vmatmul.mubr.f32.gmra.mrb[0].mxu0 %v839
        %v982 = vpop.f32.mrb[0].mxu0
        %v983 = vadd.f32 0.0, %v982
        %v984 = vpop.f32.mrb[0].mxu0
        %985 = vdwg.mxu0
        %v987 = vsel %vm808, %v710, 0
        %v990 = vsel %vm808, %v711, 0
        %v993 = vsel %vm808, %v712, 0
        %v996 = vsel %vm808, %v713, 0
        %v999 = vsel %vm808, %v714, 0
        %v1002 = vsel %vm808, %v715, 0
        %v1005 = vsel %vm808, %v716, 0
        %v1008 = vsel %vm808, %v717, 0
        %v1011 = vsel %vm808, %v718, 0
        %v1014 = vsel %vm808, %v719, 0
        %v1017 = vsel %vm808, %v720, 0
        %v1020 = vsel %vm808, %v721, 0
        %v1023 = vsel %vm808, %v722, 0
        %v1026 = vsel %vm808, %v723, 0
        %v1029 = vsel %vm808, %v724, 0
        %v1032 = vsel %vm808, %v725, 0
        %1034 = vmatprep.subr.mxu0 0.0
        %1035 = vmatpush1.msra.mxu0 %v791
        %1036 = vmatprep.subr.mxu0 0.0
        %1037 = vmatpush1.msra.mxu0 %v792
        %1038 = vmatprep.subr.mxu0 0.0
        %1039 = vmatpush1.msra.mxu0 %v793
        %1040 = vmatprep.subr.mxu0 0.0
        %1041 = vmatpush1.msra.mxu0 %v794
        %1042 = vmatprep.subr.mxu0 0.0
        %1043 = vmatpush1.msra.mxu0 %v795
        %1044 = vmatprep.subr.mxu0 0.0
        %1045 = vmatpush1.msra.mxu0 %v796
        %1046 = vmatprep.subr.mxu0 0.0
        %1047 = vmatpush1.msra.mxu0 %v797
        %1048 = vmatprep.subr.mxu0 0.0
        %1049 = vmatpush1.msra.mxu0 %v798
        %1050 = vmatprep.subr.mxu0 0.0
        %1051 = vmatpush1.msra.mxu0 0.0
        %1052 = vmatprep.subr.mxu0 0.0
        %1053 = vmatpush1.msra.mxu0 0.0
        %1054 = vmatprep.subr.mxu0 0.0
        %1055 = vmatpush1.msra.mxu0 0.0
        %1056 = vmatprep.subr.mxu0 0.0
        %1057 = vmatpush1.msra.mxu0 0.0
        %1058 = vmatprep.subr.mxu0 0.0
        %1059 = vmatpush1.msra.mxu0 0.0
        %1060 = vmatprep.subr.mxu0 0.0
        %1061 = vmatpush1.msra.mxu0 0.0
        %1062 = vmatprep.subr.mxu0 0.0
        %1063 = vmatpush1.msra.mxu0 0.0
        %1064 = vmatprep.subr.mxu0 0.0
        %1065 = vmatpush1.msra.mxu0 0.0
        %1066 = vmatprep.subr.mxu0 0.0
        %1067 = vmatpush1.msra.mxu0 0.0
        %1068 = vmatprep.subr.mxu0 0.0
        %1069 = vmatpush1.msra.mxu0 0.0
        %1070 = vmatprep.subr.mxu0 0.0
        %1071 = vmatpush1.msra.mxu0 0.0
        %1072 = vmatprep.subr.mxu0 0.0
        %1073 = vmatpush1.msra.mxu0 0.0
        %1074 = vmatprep.subr.mxu0 0.0
        %1075 = vmatpush1.msra.mxu0 0.0
        %1076 = vmatprep.subr.mxu0 0.0
        %1077 = vmatpush1.msra.mxu0 0.0
        %1078 = vmatprep.subr.mxu0 0.0
        %1079 = vmatpush1.msra.mxu0 0.0
        %1080 = vmatprep.subr.mxu0 0.0
        %1081 = vmatpush1.msra.mxu0 0.0
        %1082 = vmatprep.subr.mxu0 0.0
        %1083 = vmatpush1.msra.mxu0 0.0
        %1084 = vmatprep.subr.mxu0 0.0
        %1085 = vmatpush1.msra.mxu0 0.0
        %1086 = vmatprep.subr.mxu0 0.0
        %1087 = vmatpush1.msra.mxu0 0.0
        %1088 = vmatprep.subr.mxu0 0.0
        %1089 = vmatpush1.msra.mxu0 0.0
        %1090 = vmatprep.subr.mxu0 0.0
        %1091 = vmatpush1.msra.mxu0 0.0
        %1092 = vmatprep.subr.mxu0 0.0
        %1093 = vmatpush1.msra.mxu0 0.0
        %1094 = vmatprep.subr.mxu0 0.0
        %1095 = vmatpush1.msra.mxu0 0.0
        %1096 = vmatprep.subr.mxu0 0.0
        %1097 = vmatpush1.msra.mxu0 0.0
        %1098 = vmatprep.mubr.f32.mxu0 0.0
        %1099 = vmatmul.mubr.f32.gmra.mrb[0].mxu0 %v987
        %v1100 = vpop.f32.mrb[0].mxu0
        %v1101 = vadd.f32 %v908, %v1100
        %v1102 = vpop.f32.mrb[0].mxu0
        %1103 = vmatprep.mubr.f32.mxu0 0.0
        %1104 = vmatmul.mubr.f32.gmra.mrb[0].mxu0 %v990
        %v1105 = vpop.f32.mrb[0].mxu0
        %v1106 = vadd.f32 %v913, %v1105
        %v1107 = vpop.f32.mrb[0].mxu0
        %1108 = vmatprep.mubr.f32.mxu0 0.0
        %1109 = vmatmul.mubr.f32.gmra.mrb[0].mxu0 %v993
        %v1110 = vpop.f32.mrb[0].mxu0
        %v1111 = vadd.f32 %v918, %v1110
        %v1112 = vpop.f32.mrb[0].mxu0
        %1113 = vmatprep.mubr.f32.mxu0 0.0
        %1114 = vmatmul.mubr.f32.gmra.mrb[0].mxu0 %v996
        %v1115 = vpop.f32.mrb[0].mxu0
        %v1116 = vadd.f32 %v923, %v1115
        %v1117 = vpop.f32.mrb[0].mxu0
        %1118 = vmatprep.mubr.f32.mxu0 0.0
        %1119 = vmatmul.mubr.f32.gmra.mrb[0].mxu0 %v999
        %v1120 = vpop.f32.mrb[0].mxu0
        %v1121 = vadd.f32 %v928, %v1120
        %v1122 = vpop.f32.mrb[0].mxu0
        %1123 = vmatprep.mubr.f32.mxu0 0.0
        %1124 = vmatmul.mubr.f32.gmra.mrb[0].mxu0 %v1002
        %v1125 = vpop.f32.mrb[0].mxu0
        %v1126 = vadd.f32 %v933, %v1125
        %v1127 = vpop.f32.mrb[0].mxu0
        %1128 = vmatprep.mubr.f32.mxu0 0.0
        %1129 = vmatmul.mubr.f32.gmra.mrb[0].mxu0 %v1005
        %v1130 = vpop.f32.mrb[0].mxu0
        %v1131 = vadd.f32 %v938, %v1130
        %v1132 = vpop.f32.mrb[0].mxu0
        %1133 = vmatprep.mubr.f32.mxu0 0.0
        %1134 = vmatmul.mubr.f32.gmra.mrb[0].mxu0 %v1008
        %v1135 = vpop.f32.mrb[0].mxu0
        %v1136 = vadd.f32 %v943, %v1135
        %v1137 = vpop.f32.mrb[0].mxu0
        %1138 = vmatprep.mubr.f32.mxu0 0.0
        %1139 = vmatmul.mubr.f32.gmra.mrb[0].mxu0 %v1011
        %v1140 = vpop.f32.mrb[0].mxu0
        %v1141 = vadd.f32 %v948, %v1140
        %v1142 = vpop.f32.mrb[0].mxu0
        %1143 = vmatprep.mubr.f32.mxu0 0.0
        %1144 = vmatmul.mubr.f32.gmra.mrb[0].mxu0 %v1014
        %v1145 = vpop.f32.mrb[0].mxu0
        %v1146 = vadd.f32 %v953, %v1145
        %v1147 = vpop.f32.mrb[0].mxu0
        %1148 = vmatprep.mubr.f32.mxu0 0.0
        %1149 = vmatmul.mubr.f32.gmra.mrb[0].mxu0 %v1017
        %v1150 = vpop.f32.mrb[0].mxu0
        %v1151 = vadd.f32 %v958, %v1150
        %v1152 = vpop.f32.mrb[0].mxu0
        %1153 = vmatprep.mubr.f32.mxu0 0.0
        %1154 = vmatmul.mubr.f32.gmra.mrb[0].mxu0 %v1020
        %v1155 = vpop.f32.mrb[0].mxu0
        %v1156 = vadd.f32 %v963, %v1155
        %v1157 = vpop.f32.mrb[0].mxu0
        %1158 = vmatprep.mubr.f32.mxu0 0.0
        %1159 = vmatmul.mubr.f32.gmra.mrb[0].mxu0 %v1023
        %v1160 = vpop.f32.mrb[0].mxu0
        %v1161 = vadd.f32 %v968, %v1160
        %v1162 = vpop.f32.mrb[0].mxu0
        %1163 = vmatprep.mubr.f32.mxu0 0.0
        %1164 = vmatmul.mubr.f32.gmra.mrb[0].mxu0 %v1026
        %v1165 = vpop.f32.mrb[0].mxu0
        %v1166 = vadd.f32 %v973, %v1165
        %v1167 = vpop.f32.mrb[0].mxu0
        %1168 = vmatprep.mubr.f32.mxu0 0.0
        %1169 = vmatmul.mubr.f32.gmra.mrb[0].mxu0 %v1029
        %v1170 = vpop.f32.mrb[0].mxu0
        %v1171 = vadd.f32 %v978, %v1170
        %v1172 = vpop.f32.mrb[0].mxu0
        %1173 = vmatprep.mubr.f32.mxu0 0.0
        %1174 = vmatmul.mubr.f32.gmra.mrb[0].mxu0 %v1032
        %v1175 = vpop.f32.mrb[0].mxu0
        %v1176 = vadd.f32 %v983, %v1175
        %v1177 = vpop.f32.mrb[0].mxu0
        %1178 = vdwg.mxu0
        %s1179 = scalar_lea.vmem [#allocation2], 128
        %v1180 = vld [vmem:[%s1179] sm:$0xff]
        %v1181 = vld [vmem:[%s1179 + $0x8] sm:$0xff]
        %v1182 = vld [vmem:[%s1179 + $0x10] sm:$0xff]
        %v1183 = vld [vmem:[%s1179 + $0x18] sm:$0xff]
        %v1184 = vld [vmem:[%s1179 + $0x20] sm:$0xff]
        %v1185 = vld [vmem:[%s1179 + $0x28] sm:$0xff]
        %v1186 = vld [vmem:[%s1179 + $0x30] sm:$0xff]
        %v1187 = vld [vmem:[%s1179 + $0x38] sm:$0xff]
        %v1189 = vsel %vm808, %v775, 0
        %v1192 = vsel %vm808, %v776, 0
        %v1195 = vsel %vm808, %v777, 0
        %v1198 = vsel %vm808, %v778, 0
        %v1201 = vsel %vm808, %v779, 0
        %v1204 = vsel %vm808, %v780, 0
        %v1207 = vsel %vm808, %v781, 0
        %v1210 = vsel %vm808, %v782, 0
        %v1213 = vsel %vm808, %v783, 0
        %v1216 = vsel %vm808, %v784, 0
        %v1219 = vsel %vm808, %v785, 0
        %v1222 = vsel %vm808, %v786, 0
        %v1225 = vsel %vm808, %v787, 0
        %v1228 = vsel %vm808, %v788, 0
        %v1231 = vsel %vm808, %v789, 0
        %v1234 = vsel %vm808, %v790, 0
        %1236 = vmatprep.subr.mxu0 0.0
        %1237 = vmatpush1.msra.mxu0 %v1180
        %1238 = vmatprep.subr.mxu0 0.0
        %1239 = vmatpush1.msra.mxu0 %v1181
        %1240 = vmatprep.subr.mxu0 0.0
        %1241 = vmatpush1.msra.mxu0 %v1182
        %1242 = vmatprep.subr.mxu0 0.0
        %1243 = vmatpush1.msra.mxu0 %v1183
        %1244 = vmatprep.subr.mxu0 0.0
        %1245 = vmatpush1.msra.mxu0 %v1184
        %1246 = vmatprep.subr.mxu0 0.0
        %1247 = vmatpush1.msra.mxu0 %v1185
        %1248 = vmatprep.subr.mxu0 0.0
        %1249 = vmatpush1.msra.mxu0 %v1186
        %1250 = vmatprep.subr.mxu0 0.0
        %1251 = vmatpush1.msra.mxu0 %v1187
        %1252 = vmatprep.subr.mxu0 0.0
        %1253 = vmatpush1.msra.mxu0 0.0
        %1254 = vmatprep.subr.mxu0 0.0
        %1255 = vmatpush1.msra.mxu0 0.0
        %1256 = vmatprep.subr.mxu0 0.0
        %1257 = vmatpush1.msra.mxu0 0.0
        %1258 = vmatprep.subr.mxu0 0.0
        %1259 = vmatpush1.msra.mxu0 0.0
        %1260 = vmatprep.subr.mxu0 0.0
        %1261 = vmatpush1.msra.mxu0 0.0
        %1262 = vmatprep.subr.mxu0 0.0
        %1263 = vmatpush1.msra.mxu0 0.0
        %1264 = vmatprep.subr.mxu0 0.0
        %1265 = vmatpush1.msra.mxu0 0.0
        %1266 = vmatprep.subr.mxu0 0.0
        %1267 = vmatpush1.msra.mxu0 0.0
        %1268 = vmatprep.subr.mxu0 0.0
        %1269 = vmatpush1.msra.mxu0 0.0
        %1270 = vmatprep.subr.mxu0 0.0
        %1271 = vmatpush1.msra.mxu0 0.0
        %1272 = vmatprep.subr.mxu0 0.0
        %1273 = vmatpush1.msra.mxu0 0.0
        %1274 = vmatprep.subr.mxu0 0.0
        %1275 = vmatpush1.msra.mxu0 0.0
        %1276 = vmatprep.subr.mxu0 0.0
        %1277 = vmatpush1.msra.mxu0 0.0
        %1278 = vmatprep.subr.mxu0 0.0
        %1279 = vmatpush1.msra.mxu0 0.0
        %1280 = vmatprep.subr.mxu0 0.0
        %1281 = vmatpush1.msra.mxu0 0.0
        %1282 = vmatprep.subr.mxu0 0.0
        %1283 = vmatpush1.msra.mxu0 0.0
        %1284 = vmatprep.subr.mxu0 0.0
        %1285 = vmatpush1.msra.mxu0 0.0
        %1286 = vmatprep.subr.mxu0 0.0
        %1287 = vmatpush1.msra.mxu0 0.0
        %1288 = vmatprep.subr.mxu0 0.0
        %1289 = vmatpush1.msra.mxu0 0.0
        %1290 = vmatprep.subr.mxu0 0.0
        %1291 = vmatpush1.msra.mxu0 0.0
        %1292 = vmatprep.subr.mxu0 0.0
        %1293 = vmatpush1.msra.mxu0 0.0
        %1294 = vmatprep.subr.mxu0 0.0
        %1295 = vmatpush1.msra.mxu0 0.0
        %1296 = vmatprep.subr.mxu0 0.0
        %1297 = vmatpush1.msra.mxu0 0.0
        %1298 = vmatprep.subr.mxu0 0.0
        %1299 = vmatpush1.msra.mxu0 0.0
        %1300 = vmatprep.mubr.f32.mxu0 0.0
        %1301 = vmatmul.mubr.f32.gmra.mrb[0].mxu0 %v1189
        %v1302 = vpop.f32.mrb[0].mxu0
        %v1303 = vadd.f32 0.0, %v1302
        %v1304 = vpop.f32.mrb[0].mxu0
        %1305 = vmatprep.mubr.f32.mxu0 0.0
        %1306 = vmatmul.mubr.f32.gmra.mrb[0].mxu0 %v1192
        %v1307 = vpop.f32.mrb[0].mxu0
        %v1308 = vadd.f32 0.0, %v1307
        %v1309 = vpop.f32.mrb[0].mxu0
        %1310 = vmatprep.mubr.f32.mxu0 0.0
        %1311 = vmatmul.mubr.f32.gmra.mrb[0].mxu0 %v1195
        %v1312 = vpop.f32.mrb[0].mxu0
        %v1313 = vadd.f32 0.0, %v1312
        %v1314 = vpop.f32.mrb[0].mxu0
        %1315 = vmatprep.mubr.f32.mxu0 0.0
        %1316 = vmatmul.mubr.f32.gmra.mrb[0].mxu0 %v1198
        %v1317 = vpop.f32.mrb[0].mxu0
        %v1318 = vadd.f32 0.0, %v1317
        %v1319 = vpop.f32.mrb[0].mxu0
        %1320 = vmatprep.mubr.f32.mxu0 0.0
        %1321 = vmatmul.mubr.f32.gmra.mrb[0].mxu0 %v1201
        %v1322 = vpop.f32.mrb[0].mxu0
        %v1323 = vadd.f32 0.0, %v1322
        %v1324 = vpop.f32.mrb[0].mxu0
        %1325 = vmatprep.mubr.f32.mxu0 0.0
        %1326 = vmatmul.mubr.f32.gmra.mrb[0].mxu0 %v1204
        %v1327 = vpop.f32.mrb[0].mxu0
        %v1328 = vadd.f32 0.0, %v1327
        %v1329 = vpop.f32.mrb[0].mxu0
        %1330 = vmatprep.mubr.f32.mxu0 0.0
        %1331 = vmatmul.mubr.f32.gmra.mrb[0].mxu0 %v1207
        %v1332 = vpop.f32.mrb[0].mxu0
        %v1333 = vadd.f32 0.0, %v1332
        %v1334 = vpop.f32.mrb[0].mxu0
        %1335 = vmatprep.mubr.f32.mxu0 0.0
        %1336 = vmatmul.mubr.f32.gmra.mrb[0].mxu0 %v1210
        %v1337 = vpop.f32.mrb[0].mxu0
        %v1338 = vadd.f32 0.0, %v1337
        %v1339 = vpop.f32.mrb[0].mxu0
        %1340 = vmatprep.mubr.f32.mxu0 0.0
        %1341 = vmatmul.mubr.f32.gmra.mrb[0].mxu0 %v1213
        %v1342 = vpop.f32.mrb[0].mxu0
        %v1343 = vadd.f32 0.0, %v1342
        %v1344 = vpop.f32.mrb[0].mxu0
        %1345 = vmatprep.mubr.f32.mxu0 0.0
        %1346 = vmatmul.mubr.f32.gmra.mrb[0].mxu0 %v1216
        %v1347 = vpop.f32.mrb[0].mxu0
        %v1348 = vadd.f32 0.0, %v1347
        %v1349 = vpop.f32.mrb[0].mxu0
        %1350 = vmatprep.mubr.f32.mxu0 0.0
        %1351 = vmatmul.mubr.f32.gmra.mrb[0].mxu0 %v1219
        %v1352 = vpop.f32.mrb[0].mxu0
        %v1353 = vadd.f32 0.0, %v1352
        %v1354 = vpop.f32.mrb[0].mxu0
        %1355 = vmatprep.mubr.f32.mxu0 0.0
        %1356 = vmatmul.mubr.f32.gmra.mrb[0].mxu0 %v1222
        %v1357 = vpop.f32.mrb[0].mxu0
        %v1358 = vadd.f32 0.0, %v1357
        %v1359 = vpop.f32.mrb[0].mxu0
        %1360 = vmatprep.mubr.f32.mxu0 0.0
        %1361 = vmatmul.mubr.f32.gmra.mrb[0].mxu0 %v1225
        %v1362 = vpop.f32.mrb[0].mxu0
        %v1363 = vadd.f32 0.0, %v1362
        %v1364 = vpop.f32.mrb[0].mxu0
        %1365 = vmatprep.mubr.f32.mxu0 0.0
        %1366 = vmatmul.mubr.f32.gmra.mrb[0].mxu0 %v1228
        %v1367 = vpop.f32.mrb[0].mxu0
        %v1368 = vadd.f32 0.0, %v1367
        %v1369 = vpop.f32.mrb[0].mxu0
        %1370 = vmatprep.mubr.f32.mxu0 0.0
        %1371 = vmatmul.mubr.f32.gmra.mrb[0].mxu0 %v1231
        %v1372 = vpop.f32.mrb[0].mxu0
        %v1373 = vadd.f32 0.0, %v1372
        %v1374 = vpop.f32.mrb[0].mxu0
        %1375 = vmatprep.mubr.f32.mxu0 0.0
        %1376 = vmatmul.mubr.f32.gmra.mrb[0].mxu0 %v1234
        %v1377 = vpop.f32.mrb[0].mxu0
        %v1378 = vadd.f32 0.0, %v1377
        %v1379 = vpop.f32.mrb[0].mxu0
        %1380 = vdwg.mxu0
        %v1381 = vadd.f32 %v1101, %v1303
        %v1382 = vadd.f32 %v1106, %v1308
        %v1383 = vadd.f32 %v1111, %v1313
        %v1384 = vadd.f32 %v1116, %v1318
        %v1385 = vadd.f32 %v1121, %v1323
        %v1386 = vadd.f32 %v1126, %v1328
        %v1387 = vadd.f32 %v1131, %v1333
        %v1388 = vadd.f32 %v1136, %v1338
        %v1389 = vadd.f32 %v1141, %v1343
        %v1390 = vadd.f32 %v1146, %v1348
        %v1391 = vadd.f32 %v1151, %v1353
        %v1392 = vadd.f32 %v1156, %v1358
        %v1393 = vadd.f32 %v1161, %v1363
        %v1394 = vadd.f32 %v1166, %v1368
        %v1395 = vadd.f32 %v1171, %v1373
        %v1396 = vadd.f32 %v1176, %v1378
        %v1397 = vld [vmem:[%s2] sm:$0x1]
        %v1399 = vlaneseq
        %v1400 = vshrl.u32 %v1399, 7
        %v1401 = vsub.s32 0, %v1400
        %v1402 = vrot.slane %v1397, %v1401
        %v1404 = vadd.f32 %v1381, %v1402
        %v1405 = vadd.f32 %v1382, %v1402
        %v1406 = vadd.f32 %v1383, %v1402
        %v1407 = vadd.f32 %v1384, %v1402
        %v1408 = vadd.f32 %v1385, %v1402
        %v1409 = vadd.f32 %v1386, %v1402
        %v1410 = vadd.f32 %v1387, %v1402
        %v1411 = vadd.f32 %v1388, %v1402
        %v1412 = vadd.f32 %v1389, %v1402
        %v1413 = vadd.f32 %v1390, %v1402
        %v1414 = vadd.f32 %v1391, %v1402
        %v1415 = vadd.f32 %v1392, %v1402
        %v1416 = vadd.f32 %v1393, %v1402
        %v1417 = vadd.f32 %v1394, %v1402
        %v1418 = vadd.f32 %v1395, %v1402
        %v1419 = vadd.f32 %v1396, %v1402
        %v1420 = vmax.f32 %v1404, 0.0
        %v1421 = vmax.f32 %v1405, 0.0
        %v1422 = vmax.f32 %v1406, 0.0
        %v1423 = vmax.f32 %v1407, 0.0
        %v1424 = vmax.f32 %v1408, 0.0
        %v1425 = vmax.f32 %v1409, 0.0
        %v1426 = vmax.f32 %v1410, 0.0
        %v1427 = vmax.f32 %v1411, 0.0
        %v1428 = vmax.f32 %v1412, 0.0
        %v1429 = vmax.f32 %v1413, 0.0
        %v1430 = vmax.f32 %v1414, 0.0
        %v1431 = vmax.f32 %v1415, 0.0
        %v1432 = vmax.f32 %v1416, 0.0
        %v1433 = vmax.f32 %v1417, 0.0
        %v1434 = vmax.f32 %v1418, 0.0
        %v1435 = vmax.f32 %v1419, 0.0
        %v1452 = vrot.slane %v1420, 7
        %v1453 = vrot.slane %v1421, 7
        %v1454 = vsel %vm661, %v1452, %v1453
        %v1455 = vrot.slane %v1422, 7
        %v1456 = vsel %vm661, %v1453, %v1455
        %v1457 = vrot.slane %v1423, 7
        %v1458 = vsel %vm661, %v1455, %v1457
        %v1459 = vrot.slane %v1424, 7
        %v1460 = vsel %vm661, %v1457, %v1459
        %v1461 = vrot.slane %v1425, 7
        %v1462 = vsel %vm661, %v1459, %v1461
        %v1463 = vrot.slane %v1426, 7
        %v1464 = vsel %vm661, %v1461, %v1463
        %v1465 = vrot.slane %v1427, 7
        %v1466 = vsel %vm661, %v1463, %v1465
        %v1467 = vrot.slane %v1428, 7
        %v1468 = vsel %vm661, %v1465, %v1467
        %v1469 = vrot.slane %v1429, 7
        %v1470 = vsel %vm661, %v1467, %v1469
        %v1471 = vrot.slane %v1430, 7
        %v1472 = vsel %vm661, %v1469, %v1471
        %v1473 = vrot.slane %v1431, 7
        %v1474 = vsel %vm661, %v1471, %v1473
        %v1475 = vrot.slane %v1432, 7
        %v1476 = vsel %vm661, %v1473, %v1475
        %v1477 = vrot.slane %v1433, 7
        %v1478 = vsel %vm661, %v1475, %v1477
        %v1479 = vrot.slane %v1434, 7
        %v1480 = vsel %vm661, %v1477, %v1479
        %v1481 = vrot.slane %v1435, 7
        %v1482 = vsel %vm661, %v1479, %v1481
        %v1499 = vsel %vm661, 0.0, %v1452
        %v1500 = vmul.f32 %v1499, %v565
        %v1501 = vmul.f32 %v1454, %v566
        %v1502 = vmul.f32 %v1456, %v567
        %v1503 = vmul.f32 %v1458, %v568
        %v1504 = vmul.f32 %v1460, %v569
        %v1505 = vmul.f32 %v1462, %v570
        %v1506 = vmul.f32 %v1464, %v571
        %v1507 = vmul.f32 %v1466, %v572
        %v1508 = vmul.f32 %v1468, %v573
        %v1509 = vmul.f32 %v1470, %v574
        %v1510 = vmul.f32 %v1472, %v575
        %v1511 = vmul.f32 %v1474, %v576
        %v1512 = vmul.f32 %v1476, %v577
        %v1513 = vmul.f32 %v1478, %v578
        %v1514 = vmul.f32 %v1480, %v579
        %v1515 = vmul.f32 %v1482, %v580
        %v1516 = vrot.slane %v1420, 1
        %v1517 = vrot.slane %v1421, 1
        %v1518 = vsel %vm726, %v1516, %v1517
        %v1519 = vrot.slane %v1422, 1
        %v1520 = vsel %vm726, %v1517, %v1519
        %v1521 = vrot.slane %v1423, 1
        %v1522 = vsel %vm726, %v1519, %v1521
        %v1523 = vrot.slane %v1424, 1
        %v1524 = vsel %vm726, %v1521, %v1523
        %v1525 = vrot.slane %v1425, 1
        %v1526 = vsel %vm726, %v1523, %v1525
        %v1527 = vrot.slane %v1426, 1
        %v1528 = vsel %vm726, %v1525, %v1527
        %v1529 = vrot.slane %v1427, 1
        %v1530 = vsel %vm726, %v1527, %v1529
        %v1531 = vrot.slane %v1428, 1
        %v1532 = vsel %vm726, %v1529, %v1531
        %v1533 = vrot.slane %v1429, 1
        %v1534 = vsel %vm726, %v1531, %v1533
        %v1535 = vrot.slane %v1430, 1
        %v1536 = vsel %vm726, %v1533, %v1535
        %v1537 = vrot.slane %v1431, 1
        %v1538 = vsel %vm726, %v1535, %v1537
        %v1539 = vrot.slane %v1432, 1
        %v1540 = vsel %vm726, %v1537, %v1539
        %v1541 = vrot.slane %v1433, 1
        %v1542 = vsel %vm726, %v1539, %v1541
        %v1543 = vrot.slane %v1434, 1
        %v1544 = vsel %vm726, %v1541, %v1543
        %v1545 = vrot.slane %v1435, 1
        %v1546 = vsel %vm726, %v1543, %v1545
        %v1563 = vsel %vm726, %v1545, 0.0
        %v1564 = vmul.f32 %v1518, %v613
        %v1565 = vmul.f32 %v1520, %v614
        %v1566 = vmul.f32 %v1522, %v615
        %v1567 = vmul.f32 %v1524, %v616
        %v1568 = vmul.f32 %v1526, %v617
        %v1569 = vmul.f32 %v1528, %v618
        %v1570 = vmul.f32 %v1530, %v619
        %v1571 = vmul.f32 %v1532, %v620
        %v1572 = vmul.f32 %v1534, %v621
        %v1573 = vmul.f32 %v1536, %v622
        %v1574 = vmul.f32 %v1538, %v623
        %v1575 = vmul.f32 %v1540, %v624
        %v1576 = vmul.f32 %v1542, %v625
        %v1577 = vmul.f32 %v1544, %v626
        %v1578 = vmul.f32 %v1546, %v627
        %v1579 = vmul.f32 %v1563, %v628
        %v1580 = vld [vmem:[%s3] sm:$0xff]
        %v1581 = vld [vmem:[%s3 + $0x8] sm:$0xff]
        %v1582 = vld [vmem:[%s3 + $0x10] sm:$0xff]
        %v1583 = vld [vmem:[%s3 + $0x18] sm:$0xff]
        %v1584 = vld [vmem:[%s3 + $0x20] sm:$0xff]
        %v1585 = vld [vmem:[%s3 + $0x28] sm:$0xff]
        %v1586 = vld [vmem:[%s3 + $0x30] sm:$0xff]
        %v1587 = vld [vmem:[%s3 + $0x38] sm:$0xff]
        %v1588 = vld [vmem:[%s3 + $0x40] sm:$0xff]
        %v1589 = vld [vmem:[%s3 + $0x48] sm:$0xff]
        %v1590 = vld [vmem:[%s3 + $0x50] sm:$0xff]
        %v1591 = vld [vmem:[%s3 + $0x58] sm:$0xff]
        %v1592 = vld [vmem:[%s3 + $0x60] sm:$0xff]
        %v1593 = vld [vmem:[%s3 + $0x68] sm:$0xff]
        %v1594 = vld [vmem:[%s3 + $0x70] sm:$0xff]
        %v1595 = vld [vmem:[%s3 + $0x78] sm:$0xff]
        %s1596 = scalar_lea.vmem %s3, 128
        %v1597 = vld [vmem:[%s1596] sm:$0xff]
        %v1598 = vld [vmem:[%s1596 + $0x8] sm:$0xff]
        %v1599 = vld [vmem:[%s1596 + $0x10] sm:$0xff]
        %v1600 = vld [vmem:[%s1596 + $0x18] sm:$0xff]
        %v1601 = vld [vmem:[%s1596 + $0x20] sm:$0xff]
        %v1602 = vld [vmem:[%s1596 + $0x28] sm:$0xff]
        %v1603 = vld [vmem:[%s1596 + $0x30] sm:$0xff]
        %v1604 = vld [vmem:[%s1596 + $0x38] sm:$0xff]
        %v1605 = vld [vmem:[%s1596 + $0x40] sm:$0xff]
        %v1606 = vld [vmem:[%s1596 + $0x48] sm:$0xff]
        %v1607 = vld [vmem:[%s1596 + $0x50] sm:$0xff]
        %v1608 = vld [vmem:[%s1596 + $0x58] sm:$0xff]
        %v1609 = vld [vmem:[%s1596 + $0x60] sm:$0xff]
        %v1610 = vld [vmem:[%s1596 + $0x68] sm:$0xff]
        %v1611 = vld [vmem:[%s1596 + $0x70] sm:$0xff]
        %v1612 = vld [vmem:[%s1596 + $0x78] sm:$0xff]
        %1613 = vmatprep.subr.mxu0 0.0
        %1614 = vmatpush1.msra.mxu0 %v1597
        %1615 = vmatprep.subr.mxu0 0.0
        %1616 = vmatpush1.msra.mxu0 %v1598
        %1617 = vmatprep.subr.mxu0 0.0
        %1618 = vmatpush1.msra.mxu0 %v1599
        %1619 = vmatprep.subr.mxu0 0.0
        %1620 = vmatpush1.msra.mxu0 %v1600
        %1621 = vmatprep.subr.mxu0 0.0
        %1622 = vmatpush1.msra.mxu0 %v1601
        %1623 = vmatprep.subr.mxu0 0.0
        %1624 = vmatpush1.msra.mxu0 %v1602
        %1625 = vmatprep.subr.mxu0 0.0
        %1626 = vmatpush1.msra.mxu0 %v1603
        %1627 = vmatprep.subr.mxu0 0.0
        %1628 = vmatpush1.msra.mxu0 %v1604
        %1629 = vmatprep.subr.mxu0 0.0
        %1630 = vmatpush1.msra.mxu0 %v1605
        %1631 = vmatprep.subr.mxu0 0.0
        %1632 = vmatpush1.msra.mxu0 %v1606
        %1633 = vmatprep.subr.mxu0 0.0
        %1634 = vmatpush1.msra.mxu0 %v1607
        %1635 = vmatprep.subr.mxu0 0.0
        %1636 = vmatpush1.msra.mxu0 %v1608
        %1637 = vmatprep.subr.mxu0 0.0
        %1638 = vmatpush1.msra.mxu0 %v1609
        %1639 = vmatprep.subr.mxu0 0.0
        %1640 = vmatpush1.msra.mxu0 %v1610
        %1641 = vmatprep.subr.mxu0 0.0
        %1642 = vmatpush1.msra.mxu0 %v1611
        %1643 = vmatprep.subr.mxu0 0.0
        %1644 = vmatpush1.msra.mxu0 %v1612
        %1645 = vmatprep.subr.mxu0 0.0
        %1646 = vmatpush1.msra.mxu0 0.0
        %1647 = vmatprep.subr.mxu0 0.0
        %1648 = vmatpush1.msra.mxu0 0.0
        %1649 = vmatprep.subr.mxu0 0.0
        %1650 = vmatpush1.msra.mxu0 0.0
        %1651 = vmatprep.subr.mxu0 0.0
        %1652 = vmatpush1.msra.mxu0 0.0
        %1653 = vmatprep.subr.mxu0 0.0
        %1654 = vmatpush1.msra.mxu0 0.0
        %1655 = vmatprep.subr.mxu0 0.0
        %1656 = vmatpush1.msra.mxu0 0.0
        %1657 = vmatprep.subr.mxu0 0.0
        %1658 = vmatpush1.msra.mxu0 0.0
        %1659 = vmatprep.subr.mxu0 0.0
        %1660 = vmatpush1.msra.mxu0 0.0
        %1661 = vmatprep.subr.mxu0 0.0
        %1662 = vmatpush1.msra.mxu0 0.0
        %1663 = vmatprep.subr.mxu0 0.0
        %1664 = vmatpush1.msra.mxu0 0.0
        %1665 = vmatprep.subr.mxu0 0.0
        %1666 = vmatpush1.msra.mxu0 0.0
        %1667 = vmatprep.subr.mxu0 0.0
        %1668 = vmatpush1.msra.mxu0 0.0
        %1669 = vmatprep.subr.mxu0 0.0
        %1670 = vmatpush1.msra.mxu0 0.0
        %1671 = vmatprep.subr.mxu0 0.0
        %1672 = vmatpush1.msra.mxu0 0.0
        %1673 = vmatprep.subr.mxu0 0.0
        %1674 = vmatpush1.msra.mxu0 0.0
        %1675 = vmatprep.subr.mxu0 0.0
        %1676 = vmatpush1.msra.mxu0 0.0
        %1677 = vmatprep.mubr.f32.mxu0 0.0
        %1678 = vmatmul.mubr.f32.gmra.mrb[0].mxu0 %v1420
        %v1679 = vpop.f32.mrb[0].mxu0
        %v1680 = vadd.f32 0.0, %v1679
        %v1681 = vpop.f32.mrb[0].mxu0
        %1682 = vmatprep.mubr.f32.mxu0 0.0
        %1683 = vmatmul.mubr.f32.gmra.mrb[0].mxu0 %v1421
        %v1684 = vpop.f32.mrb[0].mxu0
        %v1685 = vadd.f32 0.0, %v1684
        %v1686 = vpop.f32.mrb[0].mxu0
        %1687 = vmatprep.mubr.f32.mxu0 0.0
        %1688 = vmatmul.mubr.f32.gmra.mrb[0].mxu0 %v1422
        %v1689 = vpop.f32.mrb[0].mxu0
        %v1690 = vadd.f32 0.0, %v1689
        %v1691 = vpop.f32.mrb[0].mxu0
        %1692 = vmatprep.mubr.f32.mxu0 0.0
        %1693 = vmatmul.mubr.f32.gmra.mrb[0].mxu0 %v1423
        %v1694 = vpop.f32.mrb[0].mxu0
        %v1695 = vadd.f32 0.0, %v1694
        %v1696 = vpop.f32.mrb[0].mxu0
        %1697 = vmatprep.mubr.f32.mxu0 0.0
        %1698 = vmatmul.mubr.f32.gmra.mrb[0].mxu0 %v1424
        %v1699 = vpop.f32.mrb[0].mxu0
        %v1700 = vadd.f32 0.0, %v1699
        %v1701 = vpop.f32.mrb[0].mxu0
        %1702 = vmatprep.mubr.f32.mxu0 0.0
        %1703 = vmatmul.mubr.f32.gmra.mrb[0].mxu0 %v1425
        %v1704 = vpop.f32.mrb[0].mxu0
        %v1705 = vadd.f32 0.0, %v1704
        %v1706 = vpop.f32.mrb[0].mxu0
        %1707 = vmatprep.mubr.f32.mxu0 0.0
        %1708 = vmatmul.mubr.f32.gmra.mrb[0].mxu0 %v1426
        %v1709 = vpop.f32.mrb[0].mxu0
        %v1710 = vadd.f32 0.0, %v1709
        %v1711 = vpop.f32.mrb[0].mxu0
        %1712 = vmatprep.mubr.f32.mxu0 0.0
        %1713 = vmatmul.mubr.f32.gmra.mrb[0].mxu0 %v1427
        %v1714 = vpop.f32.mrb[0].mxu0
        %v1715 = vadd.f32 0.0, %v1714
        %v1716 = vpop.f32.mrb[0].mxu0
        %1717 = vmatprep.mubr.f32.mxu0 0.0
        %1718 = vmatmul.mubr.f32.gmra.mrb[0].mxu0 %v1428
        %v1719 = vpop.f32.mrb[0].mxu0
        %v1720 = vadd.f32 0.0, %v1719
        %v1721 = vpop.f32.mrb[0].mxu0
        %1722 = vmatprep.mubr.f32.mxu0 0.0
        %1723 = vmatmul.mubr.f32.gmra.mrb[0].mxu0 %v1429
        %v1724 = vpop.f32.mrb[0].mxu0
        %v1725 = vadd.f32 0.0, %v1724
        %v1726 = vpop.f32.mrb[0].mxu0
        %1727 = vmatprep.mubr.f32.mxu0 0.0
        %1728 = vmatmul.mubr.f32.gmra.mrb[0].mxu0 %v1430
        %v1729 = vpop.f32.mrb[0].mxu0
        %v1730 = vadd.f32 0.0, %v1729
        %v1731 = vpop.f32.mrb[0].mxu0
        %1732 = vmatprep.mubr.f32.mxu0 0.0
        %1733 = vmatmul.mubr.f32.gmra.mrb[0].mxu0 %v1431
        %v1734 = vpop.f32.mrb[0].mxu0
        %v1735 = vadd.f32 0.0, %v1734
        %v1736 = vpop.f32.mrb[0].mxu0
        %1737 = vmatprep.mubr.f32.mxu0 0.0
        %1738 = vmatmul.mubr.f32.gmra.mrb[0].mxu0 %v1432
        %v1739 = vpop.f32.mrb[0].mxu0
        %v1740 = vadd.f32 0.0, %v1739
        %v1741 = vpop.f32.mrb[0].mxu0
        %1742 = vmatprep.mubr.f32.mxu0 0.0
        %1743 = vmatmul.mubr.f32.gmra.mrb[0].mxu0 %v1433
        %v1744 = vpop.f32.mrb[0].mxu0
        %v1745 = vadd.f32 0.0, %v1744
        %v1746 = vpop.f32.mrb[0].mxu0
        %1747 = vmatprep.mubr.f32.mxu0 0.0
        %1748 = vmatmul.mubr.f32.gmra.mrb[0].mxu0 %v1434
        %v1749 = vpop.f32.mrb[0].mxu0
        %v1750 = vadd.f32 0.0, %v1749
        %v1751 = vpop.f32.mrb[0].mxu0
        %1752 = vmatprep.mubr.f32.mxu0 0.0
        %1753 = vmatmul.mubr.f32.gmra.mrb[0].mxu0 %v1435
        %v1754 = vpop.f32.mrb[0].mxu0
        %v1755 = vadd.f32 0.0, %v1754
        %v1756 = vpop.f32.mrb[0].mxu0
        %1757 = vdwg.mxu0
        %1758 = vmatprep.subr.mxu0 0.0
        %1759 = vmatpush1.msra.mxu0 %v1580
        %1760 = vmatprep.subr.mxu0 0.0
        %1761 = vmatpush1.msra.mxu0 %v1581
        %1762 = vmatprep.subr.mxu0 0.0
        %1763 = vmatpush1.msra.mxu0 %v1582
        %1764 = vmatprep.subr.mxu0 0.0
        %1765 = vmatpush1.msra.mxu0 %v1583
        %1766 = vmatprep.subr.mxu0 0.0
        %1767 = vmatpush1.msra.mxu0 %v1584
        %1768 = vmatprep.subr.mxu0 0.0
        %1769 = vmatpush1.msra.mxu0 %v1585
        %1770 = vmatprep.subr.mxu0 0.0
        %1771 = vmatpush1.msra.mxu0 %v1586
        %1772 = vmatprep.subr.mxu0 0.0
        %1773 = vmatpush1.msra.mxu0 %v1587
        %1774 = vmatprep.subr.mxu0 0.0
        %1775 = vmatpush1.msra.mxu0 %v1588
        %1776 = vmatprep.subr.mxu0 0.0
        %1777 = vmatpush1.msra.mxu0 %v1589
        %1778 = vmatprep.subr.mxu0 0.0
        %1779 = vmatpush1.msra.mxu0 %v1590
        %1780 = vmatprep.subr.mxu0 0.0
        %1781 = vmatpush1.msra.mxu0 %v1591
        %1782 = vmatprep.subr.mxu0 0.0
        %1783 = vmatpush1.msra.mxu0 %v1592
        %1784 = vmatprep.subr.mxu0 0.0
        %1785 = vmatpush1.msra.mxu0 %v1593
        %1786 = vmatprep.subr.mxu0 0.0
        %1787 = vmatpush1.msra.mxu0 %v1594
        %1788 = vmatprep.subr.mxu0 0.0
        %1789 = vmatpush1.msra.mxu0 %v1595
        %1790 = vmatprep.subr.mxu0 0.0
        %1791 = vmatpush1.msra.mxu0 0.0
        %1792 = vmatprep.subr.mxu0 0.0
        %1793 = vmatpush1.msra.mxu0 0.0
        %1794 = vmatprep.subr.mxu0 0.0
        %1795 = vmatpush1.msra.mxu0 0.0
        %1796 = vmatprep.subr.mxu0 0.0
        %1797 = vmatpush1.msra.mxu0 0.0
        %1798 = vmatprep.subr.mxu0 0.0
        %1799 = vmatpush1.msra.mxu0 0.0
        %1800 = vmatprep.subr.mxu0 0.0
        %1801 = vmatpush1.msra.mxu0 0.0
        %1802 = vmatprep.subr.mxu0 0.0
        %1803 = vmatpush1.msra.mxu0 0.0
        %1804 = vmatprep.subr.mxu0 0.0
        %1805 = vmatpush1.msra.mxu0 0.0
        %1806 = vmatprep.subr.mxu0 0.0
        %1807 = vmatpush1.msra.mxu0 0.0
        %1808 = vmatprep.subr.mxu0 0.0
        %1809 = vmatpush1.msra.mxu0 0.0
        %1810 = vmatprep.subr.mxu0 0.0
        %1811 = vmatpush1.msra.mxu0 0.0
        %1812 = vmatprep.subr.mxu0 0.0
        %1813 = vmatpush1.msra.mxu0 0.0
        %1814 = vmatprep.subr.mxu0 0.0
        %1815 = vmatpush1.msra.mxu0 0.0
        %1816 = vmatprep.subr.mxu0 0.0
        %1817 = vmatpush1.msra.mxu0 0.0
        %1818 = vmatprep.subr.mxu0 0.0
        %1819 = vmatpush1.msra.mxu0 0.0
        %1820 = vmatprep.subr.mxu0 0.0
        %1821 = vmatpush1.msra.mxu0 0.0
        %1822 = vmatprep.mubr.f32.mxu0 0.0
        %1823 = vmatmul.mubr.f32.gmra.mrb[0].mxu0 %v1500
        %v1824 = vpop.f32.mrb[0].mxu0
        %v1825 = vadd.f32 %v1680, %v1824
        %v1826 = vpop.f32.mrb[0].mxu0
        %1827 = vmatprep.mubr.f32.mxu0 0.0
        %1828 = vmatmul.mubr.f32.gmra.mrb[0].mxu0 %v1501
        %v1829 = vpop.f32.mrb[0].mxu0
        %v1830 = vadd.f32 %v1685, %v1829
        %v1831 = vpop.f32.mrb[0].mxu0
        %1832 = vmatprep.mubr.f32.mxu0 0.0
        %1833 = vmatmul.mubr.f32.gmra.mrb[0].mxu0 %v1502
        %v1834 = vpop.f32.mrb[0].mxu0
        %v1835 = vadd.f32 %v1690, %v1834
        %v1836 = vpop.f32.mrb[0].mxu0
        %1837 = vmatprep.mubr.f32.mxu0 0.0
        %1838 = vmatmul.mubr.f32.gmra.mrb[0].mxu0 %v1503
        %v1839 = vpop.f32.mrb[0].mxu0
        %v1840 = vadd.f32 %v1695, %v1839
        %v1841 = vpop.f32.mrb[0].mxu0
        %1842 = vmatprep.mubr.f32.mxu0 0.0
        %1843 = vmatmul.mubr.f32.gmra.mrb[0].mxu0 %v1504
        %v1844 = vpop.f32.mrb[0].mxu0
        %v1845 = vadd.f32 %v1700, %v1844
        %v1846 = vpop.f32.mrb[0].mxu0
        %1847 = vmatprep.mubr.f32.mxu0 0.0
        %1848 = vmatmul.mubr.f32.gmra.mrb[0].mxu0 %v1505
        %v1849 = vpop.f32.mrb[0].mxu0
        %v1850 = vadd.f32 %v1705, %v1849
        %v1851 = vpop.f32.mrb[0].mxu0
        %1852 = vmatprep.mubr.f32.mxu0 0.0
        %1853 = vmatmul.mubr.f32.gmra.mrb[0].mxu0 %v1506
        %v1854 = vpop.f32.mrb[0].mxu0
        %v1855 = vadd.f32 %v1710, %v1854
        %v1856 = vpop.f32.mrb[0].mxu0
        %1857 = vmatprep.mubr.f32.mxu0 0.0
        %1858 = vmatmul.mubr.f32.gmra.mrb[0].mxu0 %v1507
        %v1859 = vpop.f32.mrb[0].mxu0
        %v1860 = vadd.f32 %v1715, %v1859
        %v1861 = vpop.f32.mrb[0].mxu0
        %1862 = vmatprep.mubr.f32.mxu0 0.0
        %1863 = vmatmul.mubr.f32.gmra.mrb[0].mxu0 %v1508
        %v1864 = vpop.f32.mrb[0].mxu0
        %v1865 = vadd.f32 %v1720, %v1864
        %v1866 = vpop.f32.mrb[0].mxu0
        %1867 = vmatprep.mubr.f32.mxu0 0.0
        %1868 = vmatmul.mubr.f32.gmra.mrb[0].mxu0 %v1509
        %v1869 = vpop.f32.mrb[0].mxu0
        %v1870 = vadd.f32 %v1725, %v1869
        %v1871 = vpop.f32.mrb[0].mxu0
        %1872 = vmatprep.mubr.f32.mxu0 0.0
        %1873 = vmatmul.mubr.f32.gmra.mrb[0].mxu0 %v1510
        %v1874 = vpop.f32.mrb[0].mxu0
        %v1875 = vadd.f32 %v1730, %v1874
        %v1876 = vpop.f32.mrb[0].mxu0
        %1877 = vmatprep.mubr.f32.mxu0 0.0
        %1878 = vmatmul.mubr.f32.gmra.mrb[0].mxu0 %v1511
        %v1879 = vpop.f32.mrb[0].mxu0
        %v1880 = vadd.f32 %v1735, %v1879
        %v1881 = vpop.f32.mrb[0].mxu0
        %1882 = vmatprep.mubr.f32.mxu0 0.0
        %1883 = vmatmul.mubr.f32.gmra.mrb[0].mxu0 %v1512
        %v1884 = vpop.f32.mrb[0].mxu0
        %v1885 = vadd.f32 %v1740, %v1884
        %v1886 = vpop.f32.mrb[0].mxu0
        %1887 = vmatprep.mubr.f32.mxu0 0.0
        %1888 = vmatmul.mubr.f32.gmra.mrb[0].mxu0 %v1513
        %v1889 = vpop.f32.mrb[0].mxu0
        %v1890 = vadd.f32 %v1745, %v1889
        %v1891 = vpop.f32.mrb[0].mxu0
        %1892 = vmatprep.mubr.f32.mxu0 0.0
        %1893 = vmatmul.mubr.f32.gmra.mrb[0].mxu0 %v1514
        %v1894 = vpop.f32.mrb[0].mxu0
        %v1895 = vadd.f32 %v1750, %v1894
        %v1896 = vpop.f32.mrb[0].mxu0
        %1897 = vmatprep.mubr.f32.mxu0 0.0
        %1898 = vmatmul.mubr.f32.gmra.mrb[0].mxu0 %v1515
        %v1899 = vpop.f32.mrb[0].mxu0
        %v1900 = vadd.f32 %v1755, %v1899
        %v1901 = vpop.f32.mrb[0].mxu0
        %1902 = vdwg.mxu0
        %s1903 = scalar_lea.vmem %s3, 256
        %v1904 = vld [vmem:[%s1903] sm:$0xff]
        %v1905 = vld [vmem:[%s1903 + $0x8] sm:$0xff]
        %v1906 = vld [vmem:[%s1903 + $0x10] sm:$0xff]
        %v1907 = vld [vmem:[%s1903 + $0x18] sm:$0xff]
        %v1908 = vld [vmem:[%s1903 + $0x20] sm:$0xff]
        %v1909 = vld [vmem:[%s1903 + $0x28] sm:$0xff]
        %v1910 = vld [vmem:[%s1903 + $0x30] sm:$0xff]
        %v1911 = vld [vmem:[%s1903 + $0x38] sm:$0xff]
        %v1912 = vld [vmem:[%s1903 + $0x40] sm:$0xff]
        %v1913 = vld [vmem:[%s1903 + $0x48] sm:$0xff]
        %v1914 = vld [vmem:[%s1903 + $0x50] sm:$0xff]
        %v1915 = vld [vmem:[%s1903 + $0x58] sm:$0xff]
        %v1916 = vld [vmem:[%s1903 + $0x60] sm:$0xff]
        %v1917 = vld [vmem:[%s1903 + $0x68] sm:$0xff]
        %v1918 = vld [vmem:[%s1903 + $0x70] sm:$0xff]
        %v1919 = vld [vmem:[%s1903 + $0x78] sm:$0xff]
        %1920 = vmatprep.subr.mxu0 0.0
        %1921 = vmatpush1.msra.mxu0 %v1904
        %1922 = vmatprep.subr.mxu0 0.0
        %1923 = vmatpush1.msra.mxu0 %v1905
        %1924 = vmatprep.subr.mxu0 0.0
        %1925 = vmatpush1.msra.mxu0 %v1906
        %1926 = vmatprep.subr.mxu0 0.0
        %1927 = vmatpush1.msra.mxu0 %v1907
        %1928 = vmatprep.subr.mxu0 0.0
        %1929 = vmatpush1.msra.mxu0 %v1908
        %1930 = vmatprep.subr.mxu0 0.0
        %1931 = vmatpush1.msra.mxu0 %v1909
        %1932 = vmatprep.subr.mxu0 0.0
        %1933 = vmatpush1.msra.mxu0 %v1910
        %1934 = vmatprep.subr.mxu0 0.0
        %1935 = vmatpush1.msra.mxu0 %v1911
        %1936 = vmatprep.subr.mxu0 0.0
        %1937 = vmatpush1.msra.mxu0 %v1912
        %1938 = vmatprep.subr.mxu0 0.0
        %1939 = vmatpush1.msra.mxu0 %v1913
        %1940 = vmatprep.subr.mxu0 0.0
        %1941 = vmatpush1.msra.mxu0 %v1914
        %1942 = vmatprep.subr.mxu0 0.0
        %1943 = vmatpush1.msra.mxu0 %v1915
        %1944 = vmatprep.subr.mxu0 0.0
        %1945 = vmatpush1.msra.mxu0 %v1916
        %1946 = vmatprep.subr.mxu0 0.0
        %1947 = vmatpush1.msra.mxu0 %v1917
        %1948 = vmatprep.subr.mxu0 0.0
        %1949 = vmatpush1.msra.mxu0 %v1918
        %1950 = vmatprep.subr.mxu0 0.0
        %1951 = vmatpush1.msra.mxu0 %v1919
        %1952 = vmatprep.subr.mxu0 0.0
        %1953 = vmatpush1.msra.mxu0 0.0
        %1954 = vmatprep.subr.mxu0 0.0
        %1955 = vmatpush1.msra.mxu0 0.0
        %1956 = vmatprep.subr.mxu0 0.0
        %1957 = vmatpush1.msra.mxu0 0.0
        %1958 = vmatprep.subr.mxu0 0.0
        %1959 = vmatpush1.msra.mxu0 0.0
        %1960 = vmatprep.subr.mxu0 0.0
        %1961 = vmatpush1.msra.mxu0 0.0
        %1962 = vmatprep.subr.mxu0 0.0
        %1963 = vmatpush1.msra.mxu0 0.0
        %1964 = vmatprep.subr.mxu0 0.0
        %1965 = vmatpush1.msra.mxu0 0.0
        %1966 = vmatprep.subr.mxu0 0.0
        %1967 = vmatpush1.msra.mxu0 0.0
        %1968 = vmatprep.subr.mxu0 0.0
        %1969 = vmatpush1.msra.mxu0 0.0
        %1970 = vmatprep.subr.mxu0 0.0
        %1971 = vmatpush1.msra.mxu0 0.0
        %1972 = vmatprep.subr.mxu0 0.0
        %1973 = vmatpush1.msra.mxu0 0.0
        %1974 = vmatprep.subr.mxu0 0.0
        %1975 = vmatpush1.msra.mxu0 0.0
        %1976 = vmatprep.subr.mxu0 0.0
        %1977 = vmatpush1.msra.mxu0 0.0
        %1978 = vmatprep.subr.mxu0 0.0
        %1979 = vmatpush1.msra.mxu0 0.0
        %1980 = vmatprep.subr.mxu0 0.0
        %1981 = vmatpush1.msra.mxu0 0.0
        %1982 = vmatprep.subr.mxu0 0.0
        %1983 = vmatpush1.msra.mxu0 0.0
        %1984 = vmatprep.mubr.f32.mxu0 0.0
        %1985 = vmatmul.mubr.f32.gmra.mrb[0].mxu0 %v1564
        %v1986 = vpop.f32.mrb[0].mxu0
        %v1987 = vadd.f32 0.0, %v1986
        %v1988 = vpop.f32.mrb[0].mxu0
        %1989 = vmatprep.mubr.f32.mxu0 0.0
        %1990 = vmatmul.mubr.f32.gmra.mrb[0].mxu0 %v1565
        %v1991 = vpop.f32.mrb[0].mxu0
        %v1992 = vadd.f32 0.0, %v1991
        %v1993 = vpop.f32.mrb[0].mxu0
        %1994 = vmatprep.mubr.f32.mxu0 0.0
        %1995 = vmatmul.mubr.f32.gmra.mrb[0].mxu0 %v1566
        %v1996 = vpop.f32.mrb[0].mxu0
        %v1997 = vadd.f32 0.0, %v1996
        %v1998 = vpop.f32.mrb[0].mxu0
        %1999 = vmatprep.mubr.f32.mxu0 0.0
        %2000 = vmatmul.mubr.f32.gmra.mrb[0].mxu0 %v1567
        %v2001 = vpop.f32.mrb[0].mxu0
        %v2002 = vadd.f32 0.0, %v2001
        %v2003 = vpop.f32.mrb[0].mxu0
        %2004 = vmatprep.mubr.f32.mxu0 0.0
        %2005 = vmatmul.mubr.f32.gmra.mrb[0].mxu0 %v1568
        %v2006 = vpop.f32.mrb[0].mxu0
        %v2007 = vadd.f32 0.0, %v2006
        %v2008 = vpop.f32.mrb[0].mxu0
        %2009 = vmatprep.mubr.f32.mxu0 0.0
        %2010 = vmatmul.mubr.f32.gmra.mrb[0].mxu0 %v1569
        %v2011 = vpop.f32.mrb[0].mxu0
        %v2012 = vadd.f32 0.0, %v2011
        %v2013 = vpop.f32.mrb[0].mxu0
        %2014 = vmatprep.mubr.f32.mxu0 0.0
        %2015 = vmatmul.mubr.f32.gmra.mrb[0].mxu0 %v1570
        %v2016 = vpop.f32.mrb[0].mxu0
        %v2017 = vadd.f32 0.0, %v2016
        %v2018 = vpop.f32.mrb[0].mxu0
        %2019 = vmatprep.mubr.f32.mxu0 0.0
        %2020 = vmatmul.mubr.f32.gmra.mrb[0].mxu0 %v1571
        %v2021 = vpop.f32.mrb[0].mxu0
        %v2022 = vadd.f32 0.0, %v2021
        %v2023 = vpop.f32.mrb[0].mxu0
        %2024 = vmatprep.mubr.f32.mxu0 0.0
        %2025 = vmatmul.mubr.f32.gmra.mrb[0].mxu0 %v1572
        %v2026 = vpop.f32.mrb[0].mxu0
        %v2027 = vadd.f32 0.0, %v2026
        %v2028 = vpop.f32.mrb[0].mxu0
        %2029 = vmatprep.mubr.f32.mxu0 0.0
        %2030 = vmatmul.mubr.f32.gmra.mrb[0].mxu0 %v1573
        %v2031 = vpop.f32.mrb[0].mxu0
        %v2032 = vadd.f32 0.0, %v2031
        %v2033 = vpop.f32.mrb[0].mxu0
        %2034 = vmatprep.mubr.f32.mxu0 0.0
        %2035 = vmatmul.mubr.f32.gmra.mrb[0].mxu0 %v1574
        %v2036 = vpop.f32.mrb[0].mxu0
        %v2037 = vadd.f32 0.0, %v2036
        %v2038 = vpop.f32.mrb[0].mxu0
        %2039 = vmatprep.mubr.f32.mxu0 0.0
        %2040 = vmatmul.mubr.f32.gmra.mrb[0].mxu0 %v1575
        %v2041 = vpop.f32.mrb[0].mxu0
        %v2042 = vadd.f32 0.0, %v2041
        %v2043 = vpop.f32.mrb[0].mxu0
        %2044 = vmatprep.mubr.f32.mxu0 0.0
        %2045 = vmatmul.mubr.f32.gmra.mrb[0].mxu0 %v1576
        %v2046 = vpop.f32.mrb[0].mxu0
        %v2047 = vadd.f32 0.0, %v2046
        %v2048 = vpop.f32.mrb[0].mxu0
        %2049 = vmatprep.mubr.f32.mxu0 0.0
        %2050 = vmatmul.mubr.f32.gmra.mrb[0].mxu0 %v1577
        %v2051 = vpop.f32.mrb[0].mxu0
        %v2052 = vadd.f32 0.0, %v2051
        %v2053 = vpop.f32.mrb[0].mxu0
        %2054 = vmatprep.mubr.f32.mxu0 0.0
        %2055 = vmatmul.mubr.f32.gmra.mrb[0].mxu0 %v1578
        %v2056 = vpop.f32.mrb[0].mxu0
        %v2057 = vadd.f32 0.0, %v2056
        %v2058 = vpop.f32.mrb[0].mxu0
        %2059 = vmatprep.mubr.f32.mxu0 0.0
        %2060 = vmatmul.mubr.f32.gmra.mrb[0].mxu0 %v1579
        %v2061 = vpop.f32.mrb[0].mxu0
        %v2062 = vadd.f32 0.0, %v2061
        %v2063 = vpop.f32.mrb[0].mxu0
        %2064 = vdwg.mxu0
        %v2065 = vadd.f32 %v1825, %v1987
        %v2066 = vadd.f32 %v1830, %v1992
        %v2067 = vadd.f32 %v1835, %v1997
        %v2068 = vadd.f32 %v1840, %v2002
        %v2069 = vadd.f32 %v1845, %v2007
        %v2070 = vadd.f32 %v1850, %v2012
        %v2071 = vadd.f32 %v1855, %v2017
        %v2072 = vadd.f32 %v1860, %v2022
        %v2073 = vadd.f32 %v1865, %v2027
        %v2074 = vadd.f32 %v1870, %v2032
        %v2075 = vadd.f32 %v1875, %v2037
        %v2076 = vadd.f32 %v1880, %v2042
        %v2077 = vadd.f32 %v1885, %v2047
        %v2078 = vadd.f32 %v1890, %v2052
        %v2079 = vadd.f32 %v1895, %v2057
        %v2080 = vadd.f32 %v1900, %v2062
        %v2081 = vld [vmem:[%s4] sm:$0x1]
        %v2083 = vlaneseq
        %v2084 = vshrl.u32 %v2083, 7
        %v2085 = vsub.s32 0, %v2084
        %v2086 = vrot.slane %v2081, %v2085
        %v2088 = vadd.f32 %v2065, %v2086
        %v2089 = vadd.f32 %v2066, %v2086
        %v2090 = vadd.f32 %v2067, %v2086
        %v2091 = vadd.f32 %v2068, %v2086
        %v2092 = vadd.f32 %v2069, %v2086
        %v2093 = vadd.f32 %v2070, %v2086
        %v2094 = vadd.f32 %v2071, %v2086
        %v2095 = vadd.f32 %v2072, %v2086
        %v2096 = vadd.f32 %v2073, %v2086
        %v2097 = vadd.f32 %v2074, %v2086
        %v2098 = vadd.f32 %v2075, %v2086
        %v2099 = vadd.f32 %v2076, %v2086
        %v2100 = vadd.f32 %v2077, %v2086
        %v2101 = vadd.f32 %v2078, %v2086
        %v2102 = vadd.f32 %v2079, %v2086
        %v2103 = vadd.f32 %v2080, %v2086
        %v2104 = vmax.f32 %v2088, 0.0
        %v2105 = vmax.f32 %v2089, 0.0
        %v2106 = vmax.f32 %v2090, 0.0
        %v2107 = vmax.f32 %v2091, 0.0
        %v2108 = vmax.f32 %v2092, 0.0
        %v2109 = vmax.f32 %v2093, 0.0
        %v2110 = vmax.f32 %v2094, 0.0
        %v2111 = vmax.f32 %v2095, 0.0
        %v2112 = vmax.f32 %v2096, 0.0
        %v2113 = vmax.f32 %v2097, 0.0
        %v2114 = vmax.f32 %v2098, 0.0
        %v2115 = vmax.f32 %v2099, 0.0
        %v2116 = vmax.f32 %v2100, 0.0
        %v2117 = vmax.f32 %v2101, 0.0
        %v2118 = vmax.f32 %v2102, 0.0
        %v2119 = vmax.f32 %v2103, 0.0
        %2120 = vst [vmem:[%s303] sm:$0xff] %v2104
        %2121 = vst [vmem:[%s303 + $0x8] sm:$0xff] %v2105
        %2122 = vst [vmem:[%s303 + $0x10] sm:$0xff] %v2106
        %2123 = vst [vmem:[%s303 + $0x18] sm:$0xff] %v2107
        %2124 = vst [vmem:[%s303 + $0x20] sm:$0xff] %v2108
        %2125 = vst [vmem:[%s303 + $0x28] sm:$0xff] %v2109
        %2126 = vst [vmem:[%s303 + $0x30] sm:$0xff] %v2110
        %2127 = vst [vmem:[%s303 + $0x38] sm:$0xff] %v2111
        %2128 = vst [vmem:[%s303 + $0x40] sm:$0xff] %v2112
        %2129 = vst [vmem:[%s303 + $0x48] sm:$0xff] %v2113
        %2130 = vst [vmem:[%s303 + $0x50] sm:$0xff] %v2114
        %2131 = vst [vmem:[%s303 + $0x58] sm:$0xff] %v2115
        %2132 = vst [vmem:[%s303 + $0x60] sm:$0xff] %v2116
        %2133 = vst [vmem:[%s303 + $0x68] sm:$0xff] %v2117
        %2134 = vst [vmem:[%s303 + $0x70] sm:$0xff] %v2118
        %2135 = vst [vmem:[%s303 + $0x78] sm:$0xff] %v2119
        %v2136 = vld [vmem:[%s303] ss:$2 sm:$0xff]
        %s2137 = scalar_lea.vmem %s303, 16 [#allocation7]
        %v2138 = vld [vmem:[%s2137] ss:$2 sm:$0xff]
        %s2139 = scalar_lea.vmem %s303, 32 [#allocation7]
        %v2140 = vld [vmem:[%s2139] ss:$2 sm:$0xff]
        %s2141 = scalar_lea.vmem %s303, 48 [#allocation7]
        %v2142 = vld [vmem:[%s2141] ss:$2 sm:$0xff]
        %s2143 = scalar_lea.vmem %s303, 64 [#allocation7]
        %v2144 = vld [vmem:[%s2143] ss:$2 sm:$0xff]
        %s2145 = scalar_lea.vmem %s303, 80 [#allocation7]
        %v2146 = vld [vmem:[%s2145] ss:$2 sm:$0xff]
        %s2147 = scalar_lea.vmem %s303, 96 [#allocation7]
        %v2148 = vld [vmem:[%s2147] ss:$2 sm:$0xff]
        %s2149 = scalar_lea.vmem %s303, 112 [#allocation7]
        %v2150 = vld [vmem:[%s2149] ss:$2 sm:$0xff]
        %s2151 = scalar_lea.vmem %s303, 1 [#allocation7]
        %v2152 = vld [vmem:[%s2151] ss:$2 sm:$0xff]
        %s2153 = scalar_lea.vmem %s303, 17 [#allocation7]
        %v2154 = vld [vmem:[%s2153] ss:$2 sm:$0xff]
        %s2155 = scalar_lea.vmem %s303, 33 [#allocation7]
        %v2156 = vld [vmem:[%s2155] ss:$2 sm:$0xff]
        %s2157 = scalar_lea.vmem %s303, 49 [#allocation7]
        %v2158 = vld [vmem:[%s2157] ss:$2 sm:$0xff]
        %s2159 = scalar_lea.vmem %s303, 65 [#allocation7]
        %v2160 = vld [vmem:[%s2159] ss:$2 sm:$0xff]
        %s2161 = scalar_lea.vmem %s303, 81 [#allocation7]
        %v2162 = vld [vmem:[%s2161] ss:$2 sm:$0xff]
        %s2163 = scalar_lea.vmem %s303, 97 [#allocation7]
        %v2164 = vld [vmem:[%s2163] ss:$2 sm:$0xff]
        %s2165 = scalar_lea.vmem %s303, 113 [#allocation7]
        %v2166 = vld [vmem:[%s2165] ss:$2 sm:$0xff]
        %v2167 = vmax.f32 %v2136, %v2152
        %v2168 = vmax.f32 %v2138, %v2154
        %v2169 = vmax.f32 %v2140, %v2156
        %v2170 = vmax.f32 %v2142, %v2158
        %v2171 = vmax.f32 %v2144, %v2160
        %v2172 = vmax.f32 %v2146, %v2162
        %v2173 = vmax.f32 %v2148, %v2164
        %v2174 = vmax.f32 %v2150, %v2166
        %v2175 = vld [vmem:[#allocation5] sm:$0xff]
        %v2176 = vld [vmem:[#allocation5 + $0x8] sm:$0xff]
        %v2177 = vld [vmem:[#allocation5 + $0x10] sm:$0xff]
        %v2178 = vld [vmem:[#allocation5 + $0x18] sm:$0xff]
        %v2179 = vld [vmem:[#allocation5 + $0x20] sm:$0xff]
        %v2180 = vld [vmem:[#allocation5 + $0x28] sm:$0xff]
        %v2181 = vld [vmem:[#allocation5 + $0x30] sm:$0xff]
        %v2182 = vld [vmem:[#allocation5 + $0x38] sm:$0xff]
        %v2183 = vld [vmem:[#allocation5 + $0x40] sm:$0xff]
        %v2184 = vld [vmem:[#allocation5 + $0x48] sm:$0xff]
        %v2185 = vld [vmem:[#allocation5 + $0x50] sm:$0xff]
        %v2186 = vld [vmem:[#allocation5 + $0x58] sm:$0xff]
        %v2187 = vld [vmem:[#allocation5 + $0x60] sm:$0xff]
        %v2188 = vld [vmem:[#allocation5 + $0x68] sm:$0xff]
        %v2189 = vld [vmem:[#allocation5 + $0x70] sm:$0xff]
        %v2190 = vld [vmem:[#allocation5 + $0x78] sm:$0xff]
        %2191 = vmatprep.subr.mxu0 0.0
        %2192 = vmatpush1.msra.mxu0 %v2175
        %2193 = vmatprep.subr.mxu0 0.0
        %2194 = vmatpush1.msra.mxu0 %v2176
        %2195 = vmatprep.subr.mxu0 0.0
        %2196 = vmatpush1.msra.mxu0 %v2177
        %2197 = vmatprep.subr.mxu0 0.0
        %2198 = vmatpush1.msra.mxu0 %v2178
        %2199 = vmatprep.subr.mxu0 0.0
        %2200 = vmatpush1.msra.mxu0 %v2179
        %2201 = vmatprep.subr.mxu0 0.0
        %2202 = vmatpush1.msra.mxu0 %v2180
        %2203 = vmatprep.subr.mxu0 0.0
        %2204 = vmatpush1.msra.mxu0 %v2181
        %2205 = vmatprep.subr.mxu0 0.0
        %2206 = vmatpush1.msra.mxu0 %v2182
        %2207 = vmatprep.subr.mxu0 0.0
        %2208 = vmatpush1.msra.mxu0 %v2183
        %2209 = vmatprep.subr.mxu0 0.0
        %2210 = vmatpush1.msra.mxu0 %v2184
        %2211 = vmatprep.subr.mxu0 0.0
        %2212 = vmatpush1.msra.mxu0 %v2185
        %2213 = vmatprep.subr.mxu0 0.0
        %2214 = vmatpush1.msra.mxu0 %v2186
        %2215 = vmatprep.subr.mxu0 0.0
        %2216 = vmatpush1.msra.mxu0 %v2187
        %2217 = vmatprep.subr.mxu0 0.0
        %2218 = vmatpush1.msra.mxu0 %v2188
        %2219 = vmatprep.subr.mxu0 0.0
        %2220 = vmatpush1.msra.mxu0 %v2189
        %2221 = vmatprep.subr.mxu0 0.0
        %2222 = vmatpush1.msra.mxu0 %v2190
        %2223 = vmatprep.subr.mxu0 0.0
        %2224 = vmatpush1.msra.mxu0 0.0
        %2225 = vmatprep.subr.mxu0 0.0
        %2226 = vmatpush1.msra.mxu0 0.0
        %2227 = vmatprep.subr.mxu0 0.0
        %2228 = vmatpush1.msra.mxu0 0.0
        %2229 = vmatprep.subr.mxu0 0.0
        %2230 = vmatpush1.msra.mxu0 0.0
        %2231 = vmatprep.subr.mxu0 0.0
        %2232 = vmatpush1.msra.mxu0 0.0
        %2233 = vmatprep.subr.mxu0 0.0
        %2234 = vmatpush1.msra.mxu0 0.0
        %2235 = vmatprep.subr.mxu0 0.0
        %2236 = vmatpush1.msra.mxu0 0.0
        %2237 = vmatprep.subr.mxu0 0.0
        %2238 = vmatpush1.msra.mxu0 0.0
        %2239 = vmatprep.subr.mxu0 0.0
        %2240 = vmatpush1.msra.mxu0 0.0
        %2241 = vmatprep.subr.mxu0 0.0
        %2242 = vmatpush1.msra.mxu0 0.0
        %2243 = vmatprep.subr.mxu0 0.0
        %2244 = vmatpush1.msra.mxu0 0.0
        %2245 = vmatprep.subr.mxu0 0.0
        %2246 = vmatpush1.msra.mxu0 0.0
        %2247 = vmatprep.subr.mxu0 0.0
        %2248 = vmatpush1.msra.mxu0 0.0
        %2249 = vmatprep.subr.mxu0 0.0
        %2250 = vmatpush1.msra.mxu0 0.0
        %2251 = vmatprep.subr.mxu0 0.0
        %2252 = vmatpush1.msra.mxu0 0.0
        %2253 = vmatprep.subr.mxu0 0.0
        %2254 = vmatpush1.msra.mxu0 0.0
        %2255 = vmatprep.mubr.f32.mxu0 0.0
        %2256 = vmatmul.mubr.f32.gmra.mrb[0].mxu0 %v2167
        %v2257 = vpop.f32.mrb[0].mxu0
        %v2258 = vadd.f32 0.0, %v2257
        %v2259 = vpop.f32.mrb[0].mxu0
        %2260 = vmatprep.mubr.f32.mxu0 0.0
        %2261 = vmatmul.mubr.f32.gmra.mrb[0].mxu0 %v2168
        %v2262 = vpop.f32.mrb[0].mxu0
        %v2263 = vadd.f32 0.0, %v2262
        %v2264 = vpop.f32.mrb[0].mxu0
        %2265 = vmatprep.mubr.f32.mxu0 0.0
        %2266 = vmatmul.mubr.f32.gmra.mrb[0].mxu0 %v2169
        %v2267 = vpop.f32.mrb[0].mxu0
        %v2268 = vadd.f32 0.0, %v2267
        %v2269 = vpop.f32.mrb[0].mxu0
        %2270 = vmatprep.mubr.f32.mxu0 0.0
        %2271 = vmatmul.mubr.f32.gmra.mrb[0].mxu0 %v2170
        %v2272 = vpop.f32.mrb[0].mxu0
        %v2273 = vadd.f32 0.0, %v2272
        %v2274 = vpop.f32.mrb[0].mxu0
        %2275 = vmatprep.mubr.f32.mxu0 0.0
        %2276 = vmatmul.mubr.f32.gmra.mrb[0].mxu0 %v2171
        %v2277 = vpop.f32.mrb[0].mxu0
        %v2278 = vadd.f32 0.0, %v2277
        %v2279 = vpop.f32.mrb[0].mxu0
        %2280 = vmatprep.mubr.f32.mxu0 0.0
        %2281 = vmatmul.mubr.f32.gmra.mrb[0].mxu0 %v2172
        %v2282 = vpop.f32.mrb[0].mxu0
        %v2283 = vadd.f32 0.0, %v2282
        %v2284 = vpop.f32.mrb[0].mxu0
        %2285 = vmatprep.mubr.f32.mxu0 0.0
        %2286 = vmatmul.mubr.f32.gmra.mrb[0].mxu0 %v2173
        %v2287 = vpop.f32.mrb[0].mxu0
        %v2288 = vadd.f32 0.0, %v2287
        %v2289 = vpop.f32.mrb[0].mxu0
        %2290 = vmatprep.mubr.f32.mxu0 0.0
        %2291 = vmatmul.mubr.f32.gmra.mrb[0].mxu0 %v2174
        %v2292 = vpop.f32.mrb[0].mxu0
        %v2293 = vadd.f32 0.0, %v2292
        %v2294 = vpop.f32.mrb[0].mxu0
        %2295 = vdwg.mxu0
        %2304 = vrot.lane.b32.xlu0 %v2258, 64
        %v2305 = vpop.permute.xlu0 %2304
        %2306 = vrot.lane.b32.xlu0 %v2263, 64
        %v2307 = vpop.permute.xlu0 %2306
        %2308 = vrot.lane.b32.xlu0 %v2268, 64
        %v2309 = vpop.permute.xlu0 %2308
        %2310 = vrot.lane.b32.xlu0 %v2273, 64
        %v2311 = vpop.permute.xlu0 %2310
        %2312 = vrot.lane.b32.xlu0 %v2278, 64
        %v2313 = vpop.permute.xlu0 %2312
        %2314 = vrot.lane.b32.xlu0 %v2283, 64
        %v2315 = vpop.permute.xlu0 %2314
        %2316 = vrot.lane.b32.xlu0 %v2288, 64
        %v2317 = vpop.permute.xlu0 %2316
        %2318 = vrot.lane.b32.xlu0 %v2293, 64
        %v2319 = vpop.permute.xlu0 %2318
        %v2328 = vmax.f32 %v2258, %v2305
        %v2329 = vmax.f32 %v2263, %v2307
        %v2330 = vmax.f32 %v2268, %v2309
        %v2331 = vmax.f32 %v2273, %v2311
        %v2332 = vmax.f32 %v2278, %v2313
        %v2333 = vmax.f32 %v2283, %v2315
        %v2334 = vmax.f32 %v2288, %v2317
        %v2335 = vmax.f32 %v2293, %v2319
        %2336 = vst.msk [vmem:[%s322] sm:$0xff] %vm808, %v2328
        %2337 = vst.msk [vmem:[%s322 + $0x8] sm:$0xff] %vm808, %v2329
        %2338 = vst.msk [vmem:[%s322 + $0x10] sm:$0xff] %vm808, %v2330
        %2339 = vst.msk [vmem:[%s322 + $0x18] sm:$0xff] %vm808, %v2331
        %2340 = vst.msk [vmem:[%s322 + $0x20] sm:$0xff] %vm808, %v2332
        %2341 = vst.msk [vmem:[%s322 + $0x28] sm:$0xff] %vm808, %v2333
        %2342 = vst.msk [vmem:[%s322 + $0x30] sm:$0xff] %vm808, %v2334
        %2343 = vst.msk [vmem:[%s322 + $0x38] sm:$0xff] %vm808, %v2335
        %s2344 = sand.u32 %s163, 1
        %s2345 = scalar_lea.sflag [#allocation4], %s2344
        %s2346 = sand.u32 %s163, 1
        %s2347 = smul.addr %s2346, 128
        %s2348 = scalar_lea.vmem [#allocation7], %s2347
        %s2349 = smul.u32 8, %s24
        %p2350 = scmp.lt.s32.totalorder %s2349, 15
        %s2351 = scalar_select %p2350, %s2349, 15
        %s2352 = smul.addr %s2351, 8
        %s2353 = scalar_lea.vmem %s7, %s2352
        // Predicated region
        $region53: #{down_block_forward_packed.1} parent=43 // pred_check
          %p2354 = pneg %p173
        $region54: #{down_block_forward_packed.1} parent=43 // pred_check_branch
          %2356 = sbr.rel (%p2354) target = $region56
        $region55: #{down_block_forward_packed.1} parent=43 // pred_region
          %s2357 = smul.u32 16, %s24
          %s2359 = ssub.s32 2048, 2048
          %2360 = vsyncadd %s2345, %s2359
          %s2361 = smul.addr %s2357, 128
          %s2362 = scalar_lea.hbm %s6, %s2361
          %s2363 = sshll.u32 %s2348, 4
          %s2364 = int_to_ptr.vmem [resolvable:$true] %s2363
          %2369 = dma.vmem_to_hbm [thread:$0]  %s2364, 2048, %s2362, %s2345, 128, 128, 8
        $region56: #{down_block_forward_packed.1} parent=43 // pred_fallthru
          _
        // Predicated region
        $region57: #{down_block_forward_packed.1} parent=43 // pred_check
          %p2370 = pneg %p199
        $region58: #{down_block_forward_packed.1} parent=43 // pred_check_branch
          %2372 = sbr.rel (%p2370) target = $region60
        $region59: #{down_block_forward_packed.1} parent=43 // pred_region
          %s2373 = smul.u32 8, %s24
        $region60: #{down_block_forward_packed.1} parent=43 // pred_fallthru
          _
      $region44: #{down_block_forward_packed.1} parent=5 // pred_fallthru
        _
      %p2374 = scmp.le.s32.totalorder 2, %s19
      // Predicated region
      $region61: #{down_block_forward_packed.1} parent=5 // pred_check
        %p2375 = pneg %p2374
      $region62: #{down_block_forward_packed.1} parent=5 // pred_check_branch
        %2377 = sbr.rel (%p2375) target = $region64
      $region63: #{down_block_forward_packed.1} parent=5 // pred_region
        %s2378 = ssub.s32 %s19, 2
        // Predicated region
        $region65: #{down_block_forward_packed.1} parent=63 // pred_check
          %p2379 = pneg %p179
        $region66: #{down_block_forward_packed.1} parent=63 // pred_check_branch
          %2381 = sbr.rel (%p2379) target = $region68
        $region67: #{down_block_forward_packed.1} parent=63 // pred_region
          %s2382 = sand.u32 %s164, 1
          %s2383 = scalar_lea.sflag [#allocation4], %s2382
          %s2384 = sand.u32 %s164, 1
          %s2385 = smul.addr %s2384, 128
          %s2386 = scalar_lea.vmem [#allocation7], %s2385
          %2387 = dma.done %s2383, 2048
        $region68: #{down_block_forward_packed.1} parent=63 // pred_fallthru
          _
        // Predicated region
        $region69: #{down_block_forward_packed.1} parent=63 // pred_check
          %p2388 = pneg %p205
        $region70: #{down_block_forward_packed.1} parent=63 // pred_check_branch
          %2390 = sbr.rel (%p2388) target = $region72
        $region71: #{down_block_forward_packed.1} parent=63 // pred_region
          %s2391 = smul.u32 8, %s25
          %p2392 = scmp.lt.s32.totalorder %s2391, 15
          %s2393 = scalar_select %p2392, %s2391, 15
          %s2394 = smul.addr %s2393, 8
          %s2395 = scalar_lea.vmem %s7, %s2394
        $region72: #{down_block_forward_packed.1} parent=63 // pred_fallthru
          _
      $region64: #{down_block_forward_packed.1} parent=5 // pred_fallthru
        _
    $region6: #{down_block_forward_packed.1} parent=1 // loop_footer
      %s23 = sadd.s32 1, %s19
    $region7: #{down_block_forward_packed.1} parent=1 // loop_footer_branch
      %18 = sbr.rel target = $region3
    $region8: #{down_block_forward_packed.1} parent=1 // loop_exit
      _
    %2396 = vsyncpa [#allocation3], 1
    %s2397 = scalar_lea.sflag [#allocation3], 1
    %2398 = vsyncpa %s2397, 1
    %2399 = vsyncpa [#allocation6], 1
    %2400 = vsyncpa [#allocation4], 1
    %s2401 = scalar_lea.sflag [#allocation4], 1
    %2402 = vsyncpa %s2401, 1

</llo_original>
